<compile_context>
chip_gen: v7x
topology: tpu7x:2x2x1
jax: 0.10.0
libtpu: 0.0.40
codegen_flags: <defaults>
</compile_context>

<pallas_src>
import numpy as np
import jax
import jax.numpy as jnp
from jax.experimental import pallas as pl
from jax.experimental.pallas import tpu as pltpu


# bf16 is the native MXU input dtype on v5e/v6e/v7x (perf feedback); use jnp.float32
# here if exact f32 matmuls are required.
MXU_DTYPE = jnp.bfloat16

LANE = 128
SUBLANE = 8


def _round_up(x, m):
    return (x + m - 1) // m * m


# ----------------------------- fused Pallas kernel -----------------------------

def fused_kernel(jamo_ref, xc_ref, wc_ref, cb_ref, wl_ref, lb_ref, wf_ref, fb_ref,
                 o_ref):
    """Whole NNTransformer forward for one batch tile — exactly 3 MXU matmuls.

    jamo : [S, TB, Dp]       lane-padded jamo embeddings (zeros beyond jamo_dim / batch)
    xc   : [TB, K*(Lw+Le)]   word|entity Conv1d inputs, flattened and concatenated
    wc   : [K*(Lw+Le), 2*P]  conv weights, both branches block-diag, [even | odd] halves
    cb   : [1, P]            conv bias per pooled position (word|entity, lane padded)
    wl   : [P, 2*CHp]        per-channel Linear, block-diag over channels AND branches
    lb   : [1, 2*CHp]        Linear bias (lane padded)
    wf   : [Dp+2*CHp, Tp]    final Linear weight (zero rows on every pad lane)
    fb   : [1, Tp]           final bias (lane padded)
    o    : [TB, Tp]
    """
    f32 = jnp.float32

    # ---- jamo nonzero_avg_stack: mean over non-all-zero rows ----
    # Linear-cost reduction over S (no sel matrix, no MXU op).  S is the jamo row
    # count per batch (small); the loop unrolls to S loads + a few VPU ops each.
    S = jamo_ref.shape[0]
    x0 = jamo_ref[0]                                                  # [TB, Dp]
    jsum = x0.astype(f32)
    cnt = (jnp.max(jnp.abs(x0), axis=-1, keepdims=True) > 0.0).astype(f32)  # [TB, 1]
    for s in range(1, S):
        xs = jamo_ref[s]
        jsum = jsum + xs
        cnt = cnt + (jnp.max(jnp.abs(xs), axis=-1, keepdims=True) > 0.0).astype(f32)
    j = jsum * (1.0 / jnp.maximum(cnt, 1.0))                          # [TB, Dp]

    # ---- Conv1d(k=1), both branches, both pooled positions: ONE matmul ----
    xc = xc_ref[...].astype(wc_ref.dtype)
    y = jnp.dot(xc, wc_ref[...], preferred_element_type=f32)          # [TB, 2*P]
    half = y.shape[-1] // 2
    # MaxPool1d(2): even|odd halves are 128-lane aligned; bias after the max is exact
    # because the conv is k=1 and the per-channel bias is constant across the pair.
    p = jnp.maximum(y[:, :half], y[:, half:]) + cb_ref[...]           # [TB, P]

    # ---- per-channel Linear + ReLU, both branches: ONE block-diagonal matmul ----
    h = jnp.dot(p.astype(wl_ref.dtype), wl_ref[...],
                preferred_element_type=f32) + lb_ref[...]             # [TB, 2*CHp]
    h = jnp.maximum(h, 0.0)

    # ---- final Linear over cat(j, w, e): ONE matmul (128-aligned lane concat) ----
    feat = jnp.concatenate([j, h], axis=-1)                           # [TB, Dp + 2*CHp]
    o_ref[...] = jnp.dot(feat.astype(wf_ref.dtype), wf_ref[...],
                         preferred_element_type=f32) + fb_ref[...]


# --------------------- one-time parameter restructuring ------------------------

def prepare_fused_params(params, *, cluster, channels, hid, jamo_dim, transform_dim,
                         er_dim, el_dim):
    """Restructure the PyTorch parameters into three fused, lane-padded matmul
    weights (MXU dtype) plus f32 biases.  One-time / cacheable."""
    f32 = np.float32
    C, H, K, D, T = channels, hid, cluster, jamo_dim, transform_dim
    CH = C * H
    CIw, CIe = C * er_dim, C * el_dim
    Lw, Le = 2 * er_dim, 2 * el_dim
    KLw, KLe = K * Lw, K * Le
    CIwp, CIep = _round_up(CIw, LANE), _round_up(CIe, LANE)
    P = CIwp + CIep                       # pooled width: [word | entity], lane aligned
    CHp = _round_up(CH, LANE)
    Dp = _round_up(D, LANE)
    Tp = _round_up(T, LANE)

    def conv_blocks(conv_w, in_dim):
        # [K*L, C*in_dim] conv weights with even / odd position selection folded in.
        L = 2 * in_dim
        sel_e = np.eye(L, dtype=f32)[:, 0::2]                 # [L, in_dim]
        sel_o = np.eye(L, dtype=f32)[:, 1::2]
        cw = np.asarray(conv_w, f32).T                        # [K, C]
        return np.kron(cw, sel_e), np.kron(cw, sel_o)

    cwe_w, cwo_w = conv_blocks(params["word_conv_w"], er_dim)
    cwe_e, cwo_e = conv_blocks(params["ent_conv_w"], el_dim)

    # Single conv weight: columns = [w_even(CIwp) | e_even(CIep) | w_odd | e_odd].
    Wc = np.zeros((KLw + KLe, 2 * P), f32)
    Wc[:KLw, 0:CIw] = cwe_w
    Wc[KLw:, CIwp:CIwp + CIe] = cwe_e
    Wc[:KLw, P:P + CIw] = cwo_w
    Wc[KLw:, P + CIwp:P + CIwp + CIe] = cwo_e

    cb = np.zeros((1, P), f32)
    cb[0, :CIw] = np.kron(np.asarray(params["word_conv_b"], f32), np.ones(er_dim, f32))
    cb[0, CIwp:CIwp + CIe] = np.kron(np.asarray(params["ent_conv_b"], f32),
                                     np.ones(el_dim, f32))

    # Single per-channel Linear: block-diagonal over channels AND over branches.
    Wl = np.zeros((P, 2 * CHp), f32)
    Wl[:CIw, :CH] = np.kron(np.eye(C, dtype=f32),
                            np.asarray(params["word_lin_w"], f32).T)
    Wl[CIwp:CIwp + CIe, CHp:CHp + CH] = np.kron(np.eye(C, dtype=f32),
                                                np.asarray(params["ent_lin_w"], f32).T)
    lb = np.zeros((1, 2 * CHp), f32)
    lb[0, :CH] = np.kron(np.ones(C, f32), np.asarray(params["word_lin_b"], f32))
    lb[0, CHp:CHp + CH] = np.kron(np.ones(C, f32), np.asarray(params["ent_lin_b"], f32))

    # Single final Linear over concat(j_pad, hw_pad, he_pad); zero rows on pad lanes.
    fw = np.asarray(params["final_w"], f32)                   # [T, D + 2*CH]
    Wf = np.zeros((Dp + 2 * CHp, Tp), f32)
    Wf[:D, :T] = fw[:, :D].T
    Wf[Dp:Dp + CH, :T] = fw[:, D:D + CH].T
    Wf[Dp + CHp:Dp + CHp + CH, :T] = fw[:, D + CH:D + 2 * CH].T
    fb = np.zeros((1, Tp), f32)
    fb[0, :T] = np.asarray(params["final_b"], f32)

    return dict(
        Wc=jnp.asarray(Wc, MXU_DTYPE), cb=jnp.asarray(cb),
        Wl=jnp.asarray(Wl, MXU_DTYPE), lb=jnp.asarray(lb),
        Wf=jnp.asarray(Wf, MXU_DTYPE), fb=jnp.asarray(fb),
        D=D, Dp=Dp, T=T, Tp=Tp,
    )


# ------------------------------ forward wrapper ---------------------------------

def nn_transformer_forward(jamo, word, entity, fused, *, batch_tile=512):
    """jamo [B,S,jamo_dim], word [B,K,2*er_dim], entity [B,K,2*el_dim] -> [B,transform_dim]."""
    B, S, D = jamo.shape
    _, K, Lw = word.shape
    _, _, Le = entity.shape
    Dp, Tp, T = fused["Dp"], fused["Tp"], fused["T"]

    # Pad batch to a sublane multiple and a whole number of grid tiles (unmasked
    # loads/stores; tiles shard across TensorCores on v7x and double-buffer at scale).
    Bp = _round_up(B, SUBLANE)
    TB = min(Bp, batch_tile)
    Bp = _round_up(Bp, TB)

    # Layout plumbing (zero-padding / flattening) — no compute hoisted out of the kernel.
    jamo_t = jnp.zeros((S, Bp, Dp), jnp.float32).at[:, :B, :D].set(
        jnp.transpose(jamo.astype(jnp.float32), (1, 0, 2)))
    xc = jnp.concatenate([word.reshape(B, K * Lw), entity.reshape(B, K * Le)],
                         axis=-1).astype(jnp.float32)
    xc_p = jnp.zeros((Bp, K * (Lw + Le)), jnp.float32).at[:B].set(xc).astype(
        fused["Wc"].dtype)

    grid = (Bp // TB,)
    out = pl.pallas_call(
        fused_kernel,
        out_shape=jax.ShapeDtypeStruct((Bp, Tp), jnp.float32),
        grid=grid,
        in_specs=[
            pl.BlockSpec((S, TB, Dp), lambda i: (0, i, 0)),         # jamo batch tile
            pl.BlockSpec((TB, K * (Lw + Le)), lambda i: (i, 0)),    # conv inputs tile
            pl.BlockSpec(fused["Wc"].shape, lambda i: (0, 0)),      # weights: VMEM-resident
            pl.BlockSpec(fused["cb"].shape, lambda i: (0, 0)),
            pl.BlockSpec(fused["Wl"].shape, lambda i: (0, 0)),
            pl.BlockSpec(fused["lb"].shape, lambda i: (0, 0)),
            pl.BlockSpec(fused["Wf"].shape, lambda i: (0, 0)),
            pl.BlockSpec(fused["fb"].shape, lambda i: (0, 0)),
        ],
        out_specs=pl.BlockSpec((TB, Tp), lambda i: (i, 0)),
        compiler_params=pltpu.CompilerParams(
            dimension_semantics=("parallel",)),
    )(jamo_t, xc_p, fused["Wc"], fused["cb"], fused["Wl"], fused["lb"],
      fused["Wf"], fused["fb"])
    return out[:B, :T]


# --------------------------- pure-JAX reference -----------------------------

def reference_forward(jamo, word, entity, params):
    nz = jnp.any(jamo != 0.0, axis=-1)
    cnt = jnp.maximum(jnp.sum(nz, axis=1, keepdims=True).astype(jnp.float32), 1.0)
    j = jnp.sum(jamo, axis=1) / cnt

    def branch(x, cw, cb, lw, lb):
        y = jnp.einsum("ck,bkl->bcl", cw, x) + cb[None, :, None]
        p = jnp.maximum(y[:, :, 0::2], y[:, :, 1::2])
        h = jax.nn.relu(jnp.einsum("bcl,hl->bch", p, lw) + lb[None, None, :])
        return h.reshape(x.shape[0], -1)

    w = branch(word, params["word_conv_w"], params["word_conv_b"],
               params["word_lin_w"], params["word_lin_b"])
    e = branch(entity, params["ent_conv_w"], params["ent_conv_b"],
               params["ent_lin_w"], params["ent_lin_b"])
    feat = jnp.concatenate([j, w, e], axis=-1)
    return feat @ params["final_w"].T + params["final_b"]


# --------------------------------- main -------------------------------------

if __name__ == "__main__":
    # args (small, synthetic)
    er_dim = 16           # args.er_output_dim
    el_dim = 16           # args.el_output_dim
    cluster = 4           # args.chunk_size
    channels = 4          # args.channel
    jamo_dim = 16         # args.jamo_embed_dim
    transform_dim = 32    # args.transform_dim
    hid = 100             # fixed in module
    B, S = 2, 8

    key = jax.random.PRNGKey(0)
    ks = jax.random.split(key, 16)

    def init(k, shape, scale=0.1):
        return jax.random.normal(k, shape, dtype=jnp.float32) * scale

    params = {
        "word_conv_w": init(ks[0], (channels, cluster)),   # Conv1d weight [C, K, 1] squeezed
        "word_conv_b": init(ks[1], (channels,)),
        "word_lin_w": init(ks[2], (hid, er_dim)),
        "word_lin_b": init(ks[3], (hid,)),
        "ent_conv_w": init(ks[4], (channels, cluster)),
        "ent_conv_b": init(ks[5], (channels,)),
        "ent_lin_w": init(ks[6], (hid, el_dim)),
        "ent_lin_b": init(ks[7], (hid,)),
        "final_w": init(ks[8], (transform_dim, jamo_dim + 2 * channels * hid)),
        "final_b": init(ks[9], (transform_dim,)),
    }

    jamo = init(ks[10], (B, S, jamo_dim), scale=1.0)
    # zero out some jamo rows to exercise the nonzero-averaging path
    jamo = jamo.at[:, S // 2:, :].set(0.0)
    word = init(ks[11], (B, cluster, 2 * er_dim), scale=1.0)
    entity = init(ks[12], (B, cluster, 2 * el_dim), scale=1.0)

    fused = prepare_fused_params(
        params, cluster=cluster, channels=channels, hid=hid, jamo_dim=jamo_dim,
        transform_dim=transform_dim, er_dim=er_dim, el_dim=el_dim)

    fwd = jax.jit(lambda j, w, e: nn_transformer_forward(j, w, e, fused))
    out = jax.block_until_ready(fwd(jamo, word, entity))

    ref = jax.block_until_ready(reference_forward(jamo, word, entity, params))
    assert out.shape == (B, transform_dim)

    # bf16 MXU operands (per the perf feedback) trade ~1e-3-level drift for throughput;
    # with f32 operands the kernel matches the reference to 1e-4.
    if MXU_DTYPE is jnp.bfloat16:
        rtol = atol = 3e-2
    else:
        rtol = atol = 1e-4
    np.testing.assert_allclose(np.asarray(out), np.asarray(ref), rtol=rtol, atol=atol)

    print("KERNEL_OK")
</pallas_src>

<mosaic_0001>
module attributes {stable_mosaic.version = 11 : i64} {
  func.func @fused_kernel(%arg0: i32, %arg1: memref<8x8x128xf32, #tpu.memory_space<vmem>>, %arg2: memref<8x256xbf16, #tpu.memory_space<vmem>>, %arg3: memref<256x512xbf16, #tpu.memory_space<vmem>>, %arg4: memref<1x256xf32, #tpu.memory_space<vmem>>, %arg5: memref<256x1024xbf16, #tpu.memory_space<vmem>>, %arg6: memref<1x1024xf32, #tpu.memory_space<vmem>>, %arg7: memref<1152x128xbf16, #tpu.memory_space<vmem>>, %arg8: memref<1x128xf32, #tpu.memory_space<vmem>>, %arg9: memref<8x128xf32, #tpu.memory_space<vmem>>) attributes {dimension_semantics = [#tpu.dimension_semantics<parallel>], iteration_bounds = array<i64: 1>, scalar_prefetch = 0 : i64, scratch_operands = 0 : i64, tpu.core_type = #tpu.core_type<tc>, window_params = [{transform_indices = @transform_0, window_bounds = array<i64: 8, 8, 128>}, {transform_indices = @transform_1, window_bounds = array<i64: 8, 256>}, {pipeline_mode = #tpu.pipeline_mode<synchronous>, transform_indices = @transform_2, window_bounds = array<i64: 256, 512>}, {pipeline_mode = #tpu.pipeline_mode<synchronous>, transform_indices = @transform_3, window_bounds = array<i64: 1, 256>}, {pipeline_mode = #tpu.pipeline_mode<synchronous>, transform_indices = @transform_4, window_bounds = array<i64: 256, 1024>}, {pipeline_mode = #tpu.pipeline_mode<synchronous>, transform_indices = @transform_5, window_bounds = array<i64: 1, 1024>}, {pipeline_mode = #tpu.pipeline_mode<synchronous>, transform_indices = @transform_6, window_bounds = array<i64: 1152, 128>}, {pipeline_mode = #tpu.pipeline_mode<synchronous>, transform_indices = @transform_7, window_bounds = array<i64: 1, 128>}, {transform_indices = @transform_8, window_bounds = array<i64: 8, 128>}]} {
    %c0 = arith.constant 0 : index
    %c0_0 = arith.constant 0 : index
    %c0_1 = arith.constant 0 : index
    %0 = vector.load %arg1[%c0, %c0_0, %c0_1] : memref<8x8x128xf32, #tpu.memory_space<vmem>>, vector<1x8x128xf32>
    %1 = vector.shape_cast %0 : vector<1x8x128xf32> to vector<8x128xf32>
    %2 = math.absf %1 : vector<8x128xf32>
    %cst = arith.constant dense<0xFF800000> : vector<8xf32>
    %3 = vector.multi_reduction <maximumf>, %2, %cst [1] : vector<8x128xf32> to vector<8xf32>
    %4 = vector.shape_cast %3 : vector<8xf32> to vector<8x1xf32>
    %cst_2 = arith.constant 0.000000e+00 : f32
    %5 = vector.broadcast %cst_2 : f32 to vector<8x1xf32>
    %6 = arith.cmpf ogt, %4, %5 : vector<8x1xf32>
    %7 = arith.extui %6 : vector<8x1xi1> to vector<8x1xi32>
    %8 = arith.sitofp %7 : vector<8x1xi32> to vector<8x1xf32>
    %c1 = arith.constant 1 : index
    %c0_3 = arith.constant 0 : index
    %c0_4 = arith.constant 0 : index
    %9 = vector.load %arg1[%c1, %c0_3, %c0_4] : memref<8x8x128xf32, #tpu.memory_space<vmem>>, vector<1x8x128xf32>
    %10 = vector.shape_cast %9 : vector<1x8x128xf32> to vector<8x128xf32>
    %11 = arith.addf %1, %10 : vector<8x128xf32>
    %12 = math.absf %10 : vector<8x128xf32>
    %cst_5 = arith.constant dense<0xFF800000> : vector<8xf32>
    %13 = vector.multi_reduction <maximumf>, %12, %cst_5 [1] : vector<8x128xf32> to vector<8xf32>
    %14 = vector.shape_cast %13 : vector<8xf32> to vector<8x1xf32>
    %cst_6 = arith.constant 0.000000e+00 : f32
    %15 = vector.broadcast %cst_6 : f32 to vector<8x1xf32>
    %16 = arith.cmpf ogt, %14, %15 : vector<8x1xf32>
    %17 = arith.extui %16 : vector<8x1xi1> to vector<8x1xi32>
    %18 = arith.sitofp %17 : vector<8x1xi32> to vector<8x1xf32>
    %19 = arith.addf %8, %18 : vector<8x1xf32>
    %c2 = arith.constant 2 : index
    %c0_7 = arith.constant 0 : index
    %c0_8 = arith.constant 0 : index
    %20 = vector.load %arg1[%c2, %c0_7, %c0_8] : memref<8x8x128xf32, #tpu.memory_space<vmem>>, vector<1x8x128xf32>
    %21 = vector.shape_cast %20 : vector<1x8x128xf32> to vector<8x128xf32>
    %22 = arith.addf %11, %21 : vector<8x128xf32>
    %23 = math.absf %21 : vector<8x128xf32>
    %cst_9 = arith.constant dense<0xFF800000> : vector<8xf32>
    %24 = vector.multi_reduction <maximumf>, %23, %cst_9 [1] : vector<8x128xf32> to vector<8xf32>
    %25 = vector.shape_cast %24 : vector<8xf32> to vector<8x1xf32>
    %cst_10 = arith.constant 0.000000e+00 : f32
    %26 = vector.broadcast %cst_10 : f32 to vector<8x1xf32>
    %27 = arith.cmpf ogt, %25, %26 : vector<8x1xf32>
    %28 = arith.extui %27 : vector<8x1xi1> to vector<8x1xi32>
    %29 = arith.sitofp %28 : vector<8x1xi32> to vector<8x1xf32>
    %30 = arith.addf %19, %29 : vector<8x1xf32>
    %c3 = arith.constant 3 : index
    %c0_11 = arith.constant 0 : index
    %c0_12 = arith.constant 0 : index
    %31 = vector.load %arg1[%c3, %c0_11, %c0_12] : memref<8x8x128xf32, #tpu.memory_space<vmem>>, vector<1x8x128xf32>
    %32 = vector.shape_cast %31 : vector<1x8x128xf32> to vector<8x128xf32>
    %33 = arith.addf %22, %32 : vector<8x128xf32>
    %34 = math.absf %32 : vector<8x128xf32>
    %cst_13 = arith.constant dense<0xFF800000> : vector<8xf32>
    %35 = vector.multi_reduction <maximumf>, %34, %cst_13 [1] : vector<8x128xf32> to vector<8xf32>
    %36 = vector.shape_cast %35 : vector<8xf32> to vector<8x1xf32>
    %cst_14 = arith.constant 0.000000e+00 : f32
    %37 = vector.broadcast %cst_14 : f32 to vector<8x1xf32>
    %38 = arith.cmpf ogt, %36, %37 : vector<8x1xf32>
    %39 = arith.extui %38 : vector<8x1xi1> to vector<8x1xi32>
    %40 = arith.sitofp %39 : vector<8x1xi32> to vector<8x1xf32>
    %41 = arith.addf %30, %40 : vector<8x1xf32>
    %c4 = arith.constant 4 : index
    %c0_15 = arith.constant 0 : index
    %c0_16 = arith.constant 0 : index
    %42 = vector.load %arg1[%c4, %c0_15, %c0_16] : memref<8x8x128xf32, #tpu.memory_space<vmem>>, vector<1x8x128xf32>
    %43 = vector.shape_cast %42 : vector<1x8x128xf32> to vector<8x128xf32>
    %44 = arith.addf %33, %43 : vector<8x128xf32>
    %45 = math.absf %43 : vector<8x128xf32>
    %cst_17 = arith.constant dense<0xFF800000> : vector<8xf32>
    %46 = vector.multi_reduction <maximumf>, %45, %cst_17 [1] : vector<8x128xf32> to vector<8xf32>
    %47 = vector.shape_cast %46 : vector<8xf32> to vector<8x1xf32>
    %cst_18 = arith.constant 0.000000e+00 : f32
    %48 = vector.broadcast %cst_18 : f32 to vector<8x1xf32>
    %49 = arith.cmpf ogt, %47, %48 : vector<8x1xf32>
    %50 = arith.extui %49 : vector<8x1xi1> to vector<8x1xi32>
    %51 = arith.sitofp %50 : vector<8x1xi32> to vector<8x1xf32>
    %52 = arith.addf %41, %51 : vector<8x1xf32>
    %c5 = arith.constant 5 : index
    %c0_19 = arith.constant 0 : index
    %c0_20 = arith.constant 0 : index
    %53 = vector.load %arg1[%c5, %c0_19, %c0_20] : memref<8x8x128xf32, #tpu.memory_space<vmem>>, vector<1x8x128xf32>
    %54 = vector.shape_cast %53 : vector<1x8x128xf32> to vector<8x128xf32>
    %55 = arith.addf %44, %54 : vector<8x128xf32>
    %56 = math.absf %54 : vector<8x128xf32>
    %cst_21 = arith.constant dense<0xFF800000> : vector<8xf32>
    %57 = vector.multi_reduction <maximumf>, %56, %cst_21 [1] : vector<8x128xf32> to vector<8xf32>
    %58 = vector.shape_cast %57 : vector<8xf32> to vector<8x1xf32>
    %cst_22 = arith.constant 0.000000e+00 : f32
    %59 = vector.broadcast %cst_22 : f32 to vector<8x1xf32>
    %60 = arith.cmpf ogt, %58, %59 : vector<8x1xf32>
    %61 = arith.extui %60 : vector<8x1xi1> to vector<8x1xi32>
    %62 = arith.sitofp %61 : vector<8x1xi32> to vector<8x1xf32>
    %63 = arith.addf %52, %62 : vector<8x1xf32>
    %c6 = arith.constant 6 : index
    %c0_23 = arith.constant 0 : index
    %c0_24 = arith.constant 0 : index
    %64 = vector.load %arg1[%c6, %c0_23, %c0_24] : memref<8x8x128xf32, #tpu.memory_space<vmem>>, vector<1x8x128xf32>
    %65 = vector.shape_cast %64 : vector<1x8x128xf32> to vector<8x128xf32>
    %66 = arith.addf %55, %65 : vector<8x128xf32>
    %67 = math.absf %65 : vector<8x128xf32>
    %cst_25 = arith.constant dense<0xFF800000> : vector<8xf32>
    %68 = vector.multi_reduction <maximumf>, %67, %cst_25 [1] : vector<8x128xf32> to vector<8xf32>
    %69 = vector.shape_cast %68 : vector<8xf32> to vector<8x1xf32>
    %cst_26 = arith.constant 0.000000e+00 : f32
    %70 = vector.broadcast %cst_26 : f32 to vector<8x1xf32>
    %71 = arith.cmpf ogt, %69, %70 : vector<8x1xf32>
    %72 = arith.extui %71 : vector<8x1xi1> to vector<8x1xi32>
    %73 = arith.sitofp %72 : vector<8x1xi32> to vector<8x1xf32>
    %74 = arith.addf %63, %73 : vector<8x1xf32>
    %c7 = arith.constant 7 : index
    %c0_27 = arith.constant 0 : index
    %c0_28 = arith.constant 0 : index
    %75 = vector.load %arg1[%c7, %c0_27, %c0_28] : memref<8x8x128xf32, #tpu.memory_space<vmem>>, vector<1x8x128xf32>
    %76 = vector.shape_cast %75 : vector<1x8x128xf32> to vector<8x128xf32>
    %77 = arith.addf %66, %76 : vector<8x128xf32>
    %78 = math.absf %76 : vector<8x128xf32>
    %cst_29 = arith.constant dense<0xFF800000> : vector<8xf32>
    %79 = vector.multi_reduction <maximumf>, %78, %cst_29 [1] : vector<8x128xf32> to vector<8xf32>
    %80 = vector.shape_cast %79 : vector<8xf32> to vector<8x1xf32>
    %cst_30 = arith.constant 0.000000e+00 : f32
    %81 = vector.broadcast %cst_30 : f32 to vector<8x1xf32>
    %82 = arith.cmpf ogt, %80, %81 : vector<8x1xf32>
    %83 = arith.extui %82 : vector<8x1xi1> to vector<8x1xi32>
    %84 = arith.sitofp %83 : vector<8x1xi32> to vector<8x1xf32>
    %85 = arith.addf %74, %84 : vector<8x1xf32>
    %cst_31 = arith.constant 1.000000e+00 : f32
    %86 = vector.broadcast %cst_31 : f32 to vector<8x1xf32>
    %87 = arith.maximumf %85, %86 : vector<8x1xf32>
    %cst_32 = arith.constant 1.000000e+00 : f32
    %88 = vector.broadcast %cst_32 : f32 to vector<8x1xf32>
    %89 = arith.divf %88, %87 : vector<8x1xf32>
    %90 = vector.broadcast %89 : vector<8x1xf32> to vector<8x128xf32>
    %91 = arith.mulf %77, %90 : vector<8x128xf32>
    %c0_33 = arith.constant 0 : index
    %c0_34 = arith.constant 0 : index
    %92 = vector.load %arg2[%c0_33, %c0_34] : memref<8x256xbf16, #tpu.memory_space<vmem>>, vector<8x256xbf16>
    %c0_35 = arith.constant 0 : index
    %c0_36 = arith.constant 0 : index
    %93 = vector.load %arg3[%c0_35, %c0_36] : memref<256x512xbf16, #tpu.memory_space<vmem>>, vector<256x512xbf16>
    %cst_37 = arith.constant dense<0.000000e+00> : vector<8x512xf32>
    %94 = tpu.matmul %92, %93, %cst_37 {dimension_numbers = #tpu.dot_dimension_numbers<[1], [0], [0], [1], [0, 0, 1, 1], [], []>} : vector<8x256xbf16>, vector<256x512xbf16>, vector<8x512xf32> -> vector<8x512xf32>
    %95 = vector.extract_strided_slice %94 {offsets = [0, 0], sizes = [8, 256], strides = [1, 1]} : vector<8x512xf32> to vector<8x256xf32>
    %96 = vector.extract_strided_slice %94 {offsets = [0, 256], sizes = [8, 256], strides = [1, 1]} : vector<8x512xf32> to vector<8x256xf32>
    %97 = arith.maximumf %95, %96 : vector<8x256xf32>
    %c0_38 = arith.constant 0 : index
    %c0_39 = arith.constant 0 : index
    %98 = vector.load %arg4[%c0_38, %c0_39] : memref<1x256xf32, #tpu.memory_space<vmem>>, vector<1x256xf32>
    %99 = vector.broadcast %98 : vector<1x256xf32> to vector<8x256xf32>
    %100 = arith.addf %97, %99 : vector<8x256xf32>
    %101 = arith.truncf %100 : vector<8x256xf32> to vector<8x256xbf16>
    %c0_40 = arith.constant 0 : index
    %c0_41 = arith.constant 0 : index
    %102 = vector.load %arg5[%c0_40, %c0_41] : memref<256x1024xbf16, #tpu.memory_space<vmem>>, vector<256x1024xbf16>
    %cst_42 = arith.constant dense<0.000000e+00> : vector<8x1024xf32>
    %103 = tpu.matmul %101, %102, %cst_42 {dimension_numbers = #tpu.dot_dimension_numbers<[1], [0], [0], [1], [0, 0, 1, 1], [], []>} : vector<8x256xbf16>, vector<256x1024xbf16>, vector<8x1024xf32> -> vector<8x1024xf32>
    %c0_43 = arith.constant 0 : index
    %c0_44 = arith.constant 0 : index
    %104 = vector.load %arg6[%c0_43, %c0_44] : memref<1x1024xf32, #tpu.memory_space<vmem>>, vector<1x1024xf32>
    %105 = vector.broadcast %104 : vector<1x1024xf32> to vector<8x1024xf32>
    %106 = arith.addf %103, %105 : vector<8x1024xf32>
    %cst_45 = arith.constant 0.000000e+00 : f32
    %107 = vector.broadcast %cst_45 : f32 to vector<8x1024xf32>
    %108 = arith.maximumf %106, %107 : vector<8x1024xf32>
    %109 = tpu.concatenate %91, %108 in 1 : vector<8x128xf32>, vector<8x1024xf32> -> vector<8x1152xf32>
    %110 = arith.truncf %109 : vector<8x1152xf32> to vector<8x1152xbf16>
    %c0_46 = arith.constant 0 : index
    %c0_47 = arith.constant 0 : index
    %111 = vector.load %arg7[%c0_46, %c0_47] : memref<1152x128xbf16, #tpu.memory_space<vmem>>, vector<1152x128xbf16>
    %cst_48 = arith.constant dense<0.000000e+00> : vector<8x128xf32>
    %112 = tpu.matmul %110, %111, %cst_48 {dimension_numbers = #tpu.dot_dimension_numbers<[1], [0], [0], [1], [0, 0, 1, 1], [], []>} : vector<8x1152xbf16>, vector<1152x128xbf16>, vector<8x128xf32> -> vector<8x128xf32>
    %c0_49 = arith.constant 0 : index
    %c0_50 = arith.constant 0 : index
    %113 = vector.load %arg8[%c0_49, %c0_50] : memref<1x128xf32, #tpu.memory_space<vmem>>, vector<1x128xf32>
    %114 = vector.broadcast %113 : vector<1x128xf32> to vector<8x128xf32>
    %115 = arith.addf %112, %114 : vector<8x128xf32>
    %c0_51 = arith.constant 0 : index
    %c0_52 = arith.constant 0 : index
    %116 = vector.load %arg9[%c0_51, %c0_52] : memref<8x128xf32, #tpu.memory_space<vmem>>, vector<8x128xf32>
    tpu.vector_store %arg9[%c0_51, %c0_52], %115 {strides = array<i32>} : memref<8x128xf32, #tpu.memory_space<vmem>>, vector<8x128xf32>,
    return
  }
  func.func @transform_0(%arg0: i32) -> (i32, i32, i32) {
    %c0_i32 = arith.constant 0 : i32
    %c0_i32_0 = arith.constant 0 : i32
    %c0_i32_1 = arith.constant 0 : i32
    return %c0_i32, %arg0, %c0_i32_0 : i32, i32, i32
  }
  func.func @transform_1(%arg0: i32) -> (i32, i32) {
    %c0_i32 = arith.constant 0 : i32
    %c0_i32_0 = arith.constant 0 : i32
    return %arg0, %c0_i32 : i32, i32
  }
  func.func @transform_2(%arg0: i32) -> (i32, i32) {
    %c0_i32 = arith.constant 0 : i32
    %c0_i32_0 = arith.constant 0 : i32
    %c0_i32_1 = arith.constant 0 : i32
    return %c0_i32, %c0_i32_0 : i32, i32
  }
  func.func @transform_3(%arg0: i32) -> (i32, i32) {
    %c0_i32 = arith.constant 0 : i32
    %c0_i32_0 = arith.constant 0 : i32
    %c0_i32_1 = arith.constant 0 : i32
    return %c0_i32, %c0_i32_0 : i32, i32
  }
  func.func @transform_4(%arg0: i32) -> (i32, i32) {
    %c0_i32 = arith.constant 0 : i32
    %c0_i32_0 = arith.constant 0 : i32
    %c0_i32_1 = arith.constant 0 : i32
    return %c0_i32, %c0_i32_0 : i32, i32
  }
  func.func @transform_5(%arg0: i32) -> (i32, i32) {
    %c0_i32 = arith.constant 0 : i32
    %c0_i32_0 = arith.constant 0 : i32
    %c0_i32_1 = arith.constant 0 : i32
    return %c0_i32, %c0_i32_0 : i32, i32
  }
  func.func @transform_6(%arg0: i32) -> (i32, i32) {
    %c0_i32 = arith.constant 0 : i32
    %c0_i32_0 = arith.constant 0 : i32
    %c0_i32_1 = arith.constant 0 : i32
    return %c0_i32, %c0_i32_0 : i32, i32
  }
  func.func @transform_7(%arg0: i32) -> (i32, i32) {
    %c0_i32 = arith.constant 0 : i32
    %c0_i32_0 = arith.constant 0 : i32
    %c0_i32_1 = arith.constant 0 : i32
    return %c0_i32, %c0_i32_0 : i32, i32
  }
  func.func @transform_8(%arg0: i32) -> (i32, i32) {
    %c0_i32 = arith.constant 0 : i32
    %c0_i32_0 = arith.constant 0 : i32
    return %arg0, %c0_i32 : i32, i32
  }
}

</mosaic_0001>

<llo_original>
// kernel: _lambda_.1
$region0: #{_lambda_.1}
  #allocation0 [shape = 'u32[]', space=smem, size = 0x4, offset = 0x4, fixed_abs, tag = 'smem constant byte address 0x4 - core index']
  #allocation1 [shape = 'u32[144,128]{1,0:T(1,128)}', space=vmem, size = 0x12000, scoped, tag = 'internal scratch']
  %s0 = inlined_call_operand.vmem [shape: f32[8,8,128], index: 0, kind: input, shape index: {}]
  %s1 = inlined_call_operand.vmem [shape: bf16[8,256], index: 1, kind: input, shape index: {}]
  %s2 = inlined_call_operand.vmem [shape: bf16[256,512], index: 2, kind: input, shape index: {}]
  %s3 = inlined_call_operand.vmem [shape: f32[1,256], index: 3, kind: input, shape index: {}]
  %s4 = inlined_call_operand.vmem [shape: bf16[256,1024], index: 4, kind: input, shape index: {}]
  %s5 = inlined_call_operand.vmem [shape: f32[1,1024], index: 5, kind: input, shape index: {}]
  %s6 = inlined_call_operand.vmem [shape: bf16[1152,128], index: 6, kind: input, shape index: {}]
  %s7 = inlined_call_operand.vmem [shape: f32[1,128], index: 7, kind: input, shape index: {}]
  %s8 = inlined_call_operand.vmem [shape: f32[8,128], index: 8, kind: output, shape index: {}]
  %s9 = sld [smem:[#allocation0]]
  $region42: #{_lambda_.1} parent=0
    _
  %s11 = ssub.s32 1, %s9
  %s12 = scalar_select 0, %s11, %s9
  // Predicated region
  $region2: #{_lambda_.1} parent=0 // pred_check
    _
  $region3: #{_lambda_.1} parent=0 // pred_check_branch
    %14 = sbr.rel (0) target = $region5
  $region4: #{_lambda_.1} parent=0 // pred_region
    _
  $region5: #{_lambda_.1} parent=0 // pred_fallthru
    _
  // Predicated region
  $region6: #{_lambda_.1} parent=0 // pred_check
    _
  $region7: #{_lambda_.1} parent=0 // pred_check_branch
    %16 = sbr.rel (0) target = $region9
  $region8: #{_lambda_.1} parent=0 // pred_region
    _
  $region9: #{_lambda_.1} parent=0 // pred_fallthru
    _
  // Predicated region
  $region10: #{_lambda_.1} parent=0 // pred_check
    _
  $region11: #{_lambda_.1} parent=0 // pred_check_branch
    %18 = sbr.rel (0) target = $region13
  $region12: #{_lambda_.1} parent=0 // pred_region
    _
  $region13: #{_lambda_.1} parent=0 // pred_fallthru
    _
  // Predicated region
  $region14: #{_lambda_.1} parent=0 // pred_check
    _
  $region15: #{_lambda_.1} parent=0 // pred_check_branch
    %20 = sbr.rel (0) target = $region17
  $region16: #{_lambda_.1} parent=0 // pred_region
    _
  $region17: #{_lambda_.1} parent=0 // pred_fallthru
    _
  // Predicated region
  $region18: #{_lambda_.1} parent=0 // pred_check
    _
  $region19: #{_lambda_.1} parent=0 // pred_check_branch
    %22 = sbr.rel (0) target = $region21
  $region20: #{_lambda_.1} parent=0 // pred_region
    _
  $region21: #{_lambda_.1} parent=0 // pred_fallthru
    _
  // Predicated region
  $region22: #{_lambda_.1} parent=0 // pred_check
    _
  $region23: #{_lambda_.1} parent=0 // pred_check_branch
    %24 = sbr.rel (0) target = $region25
  $region24: #{_lambda_.1} parent=0 // pred_region
    _
  $region25: #{_lambda_.1} parent=0 // pred_fallthru
    _
  // Predicated region
  $region26: #{_lambda_.1} parent=0 // pred_check
    _
  $region27: #{_lambda_.1} parent=0 // pred_check_branch
    %26 = sbr.rel (0) target = $region29
  $region28: #{_lambda_.1} parent=0 // pred_region
    _
  $region29: #{_lambda_.1} parent=0 // pred_fallthru
    _
  // Predicated region
  $region30: #{_lambda_.1} parent=0 // pred_check
    _
  $region31: #{_lambda_.1} parent=0 // pred_check_branch
    %28 = sbr.rel (0) target = $region33
  $region32: #{_lambda_.1} parent=0 // pred_region
    _
  $region33: #{_lambda_.1} parent=0 // pred_fallthru
    _
  %v30 = vld [vmem:[%s0] sm:$0xff]
  %v31 = vand.u32 2147483647, %v30
  %32 = vmax.xlane.f32.xlu0 %v31
  %v33 = vpop.xlane.xlu0 %32
  %vm34 = vcmp.gt.f32.partialorder %v33, 0.0
  %v35 = vsel %vm34, 1, 0
  %v36 = vcvt.s32.f32 %v35
  %s37 = scalar_lea.vmem %s0, 8
  %v38 = vld [vmem:[%s37] sm:$0xff]
  %v39 = vadd.f32 %v30, %v38
  %v40 = vand.u32 2147483647, %v38
  %41 = vmax.xlane.f32.xlu0 %v40
  %v42 = vpop.xlane.xlu0 %41
  %vm43 = vcmp.gt.f32.partialorder %v42, 0.0
  %v44 = vsel %vm43, 1, 0
  %v45 = vcvt.s32.f32 %v44
  %v46 = vadd.f32 %v36, %v45
  %s47 = scalar_lea.vmem %s0, 16
  %v48 = vld [vmem:[%s47] sm:$0xff]
  %v49 = vadd.f32 %v39, %v48
  %v50 = vand.u32 2147483647, %v48
  %51 = vmax.xlane.f32.xlu0 %v50
  %v52 = vpop.xlane.xlu0 %51
  %vm53 = vcmp.gt.f32.partialorder %v52, 0.0
  %v54 = vsel %vm53, 1, 0
  %v55 = vcvt.s32.f32 %v54
  %v56 = vadd.f32 %v46, %v55
  %s57 = scalar_lea.vmem %s0, 24
  %v58 = vld [vmem:[%s57] sm:$0xff]
  %v59 = vadd.f32 %v49, %v58
  %v60 = vand.u32 2147483647, %v58
  %61 = vmax.xlane.f32.xlu0 %v60
  %v62 = vpop.xlane.xlu0 %61
  %vm63 = vcmp.gt.f32.partialorder %v62, 0.0
  %v64 = vsel %vm63, 1, 0
  %v65 = vcvt.s32.f32 %v64
  %v66 = vadd.f32 %v56, %v65
  %s67 = scalar_lea.vmem %s0, 32
  %v68 = vld [vmem:[%s67] sm:$0xff]
  %v69 = vadd.f32 %v59, %v68
  %v70 = vand.u32 2147483647, %v68
  %71 = vmax.xlane.f32.xlu0 %v70
  %v72 = vpop.xlane.xlu0 %71
  %vm73 = vcmp.gt.f32.partialorder %v72, 0.0
  %v74 = vsel %vm73, 1, 0
  %v75 = vcvt.s32.f32 %v74
  %v76 = vadd.f32 %v66, %v75
  %s77 = scalar_lea.vmem %s0, 40
  %v78 = vld [vmem:[%s77] sm:$0xff]
  %v79 = vadd.f32 %v69, %v78
  %v80 = vand.u32 2147483647, %v78
  %81 = vmax.xlane.f32.xlu0 %v80
  %v82 = vpop.xlane.xlu0 %81
  %vm83 = vcmp.gt.f32.partialorder %v82, 0.0
  %v84 = vsel %vm83, 1, 0
  %v85 = vcvt.s32.f32 %v84
  %v86 = vadd.f32 %v76, %v85
  %s87 = scalar_lea.vmem %s0, 48
  %v88 = vld [vmem:[%s87] sm:$0xff]
  %v89 = vadd.f32 %v79, %v88
  %v90 = vand.u32 2147483647, %v88
  %91 = vmax.xlane.f32.xlu0 %v90
  %v92 = vpop.xlane.xlu0 %91
  %vm93 = vcmp.gt.f32.partialorder %v92, 0.0
  %v94 = vsel %vm93, 1, 0
  %v95 = vcvt.s32.f32 %v94
  %v96 = vadd.f32 %v86, %v95
  %s97 = scalar_lea.vmem %s0, 56
  %v98 = vld [vmem:[%s97] sm:$0xff]
  %v99 = vadd.f32 %v89, %v98
  %v100 = vand.u32 2147483647, %v98
  %101 = vmax.xlane.f32.xlu0 %v100
  %v102 = vpop.xlane.xlu0 %101
  %vm103 = vcmp.gt.f32.partialorder %v102, 0.0
  %v104 = vsel %vm103, 1, 0
  %v105 = vcvt.s32.f32 %v104
  %v106 = vadd.f32 %v96, %v105
  %v107 = vmax.f32 %v106, 1.0
  %v108 = vrcp.pop %v107
  %v109 = vmul.f32 1.0, %v108
  %v110 = vmul.f32 %v99, %v109
  %v111 = vld [vmem:[%s1] sm:$0xff]
  %v112 = vld [vmem:[%s2] sm:$0xff]
  %v113 = vld [vmem:[%s2 + $0x8] sm:$0xff]
  %v114 = vld [vmem:[%s2 + $0x10] sm:$0xff]
  %v115 = vld [vmem:[%s2 + $0x18] sm:$0xff]
  %v116 = vld [vmem:[%s2 + $0x20] sm:$0xff]
  %v117 = vld [vmem:[%s2 + $0x28] sm:$0xff]
  %v118 = vld [vmem:[%s2 + $0x30] sm:$0xff]
  %v119 = vld [vmem:[%s2 + $0x38] sm:$0xff]
  %v120 = vld [vmem:[%s2 + $0x40] sm:$0xff]
  %v121 = vld [vmem:[%s2 + $0x48] sm:$0xff]
  %v122 = vld [vmem:[%s2 + $0x50] sm:$0xff]
  %v123 = vld [vmem:[%s2 + $0x58] sm:$0xff]
  %v124 = vld [vmem:[%s2 + $0x60] sm:$0xff]
  %v125 = vld [vmem:[%s2 + $0x68] sm:$0xff]
  %v126 = vld [vmem:[%s2 + $0x70] sm:$0xff]
  %v127 = vld [vmem:[%s2 + $0x78] sm:$0xff]
  %v128 = vld [vmem:[%s2 + $0x80] sm:$0xff]
  %v129 = vld [vmem:[%s2 + $0x88] sm:$0xff]
  %v130 = vld [vmem:[%s2 + $0x90] sm:$0xff]
  %v131 = vld [vmem:[%s2 + $0x98] sm:$0xff]
  %v132 = vld [vmem:[%s2 + $0xa0] sm:$0xff]
  %v133 = vld [vmem:[%s2 + $0xa8] sm:$0xff]
  %v134 = vld [vmem:[%s2 + $0xb0] sm:$0xff]
  %v135 = vld [vmem:[%s2 + $0xb8] sm:$0xff]
  %v136 = vld [vmem:[%s2 + $0xc0] sm:$0xff]
  %v137 = vld [vmem:[%s2 + $0xc8] sm:$0xff]
  %v138 = vld [vmem:[%s2 + $0xd0] sm:$0xff]
  %v139 = vld [vmem:[%s2 + $0xd8] sm:$0xff]
  %v140 = vld [vmem:[%s2 + $0xe0] sm:$0xff]
  %v141 = vld [vmem:[%s2 + $0xe8] sm:$0xff]
  %v142 = vld [vmem:[%s2 + $0xf0] sm:$0xff]
  %v143 = vld [vmem:[%s2 + $0xf8] sm:$0xff]
  %v144 = vld [vmem:[%s2 + $0x100] sm:$0xff]
  %v145 = vld [vmem:[%s2 + $0x108] sm:$0xff]
  %v146 = vld [vmem:[%s2 + $0x110] sm:$0xff]
  %v147 = vld [vmem:[%s2 + $0x118] sm:$0xff]
  %v148 = vld [vmem:[%s2 + $0x120] sm:$0xff]
  %v149 = vld [vmem:[%s2 + $0x128] sm:$0xff]
  %v150 = vld [vmem:[%s2 + $0x130] sm:$0xff]
  %v151 = vld [vmem:[%s2 + $0x138] sm:$0xff]
  %v152 = vld [vmem:[%s2 + $0x140] sm:$0xff]
  %v153 = vld [vmem:[%s2 + $0x148] sm:$0xff]
  %v154 = vld [vmem:[%s2 + $0x150] sm:$0xff]
  %v155 = vld [vmem:[%s2 + $0x158] sm:$0xff]
  %v156 = vld [vmem:[%s2 + $0x160] sm:$0xff]
  %v157 = vld [vmem:[%s2 + $0x168] sm:$0xff]
  %v158 = vld [vmem:[%s2 + $0x170] sm:$0xff]
  %v159 = vld [vmem:[%s2 + $0x178] sm:$0xff]
  %v160 = vld [vmem:[%s2 + $0x180] sm:$0xff]
  %v161 = vld [vmem:[%s2 + $0x188] sm:$0xff]
  %v162 = vld [vmem:[%s2 + $0x190] sm:$0xff]
  %v163 = vld [vmem:[%s2 + $0x198] sm:$0xff]
  %v164 = vld [vmem:[%s2 + $0x1a0] sm:$0xff]
  %v165 = vld [vmem:[%s2 + $0x1a8] sm:$0xff]
  %v166 = vld [vmem:[%s2 + $0x1b0] sm:$0xff]
  %v167 = vld [vmem:[%s2 + $0x1b8] sm:$0xff]
  %v168 = vld [vmem:[%s2 + $0x1c0] sm:$0xff]
  %v169 = vld [vmem:[%s2 + $0x1c8] sm:$0xff]
  %v170 = vld [vmem:[%s2 + $0x1d0] sm:$0xff]
  %v171 = vld [vmem:[%s2 + $0x1d8] sm:$0xff]
  %v172 = vld [vmem:[%s2 + $0x1e0] sm:$0xff]
  %v173 = vld [vmem:[%s2 + $0x1e8] sm:$0xff]
  %v174 = vld [vmem:[%s2 + $0x1f0] sm:$0xff]
  %v175 = vld [vmem:[%s2 + $0x1f8] sm:$0xff]
  %v177 = vunpack.c.l.b16 %v111
  %v178 = vunpack.c.h.b16 %v111
  %v179 = vpack.c.b16 %v177, %v177
  %v180 = vpack.c.b16 %v178, %v178
  %v247 = vunpack.c.l.b16 %v112
  %v248 = vunpack.c.h.b16 %v112
  %v249 = vunpack.c.l.b16 %v113
  %v250 = vunpack.c.h.b16 %v113
  %v251 = vunpack.c.l.b16 %v114
  %v252 = vunpack.c.h.b16 %v114
  %v253 = vunpack.c.l.b16 %v115
  %v254 = vunpack.c.h.b16 %v115
  %v255 = vunpack.c.l.b16 %v116
  %v256 = vunpack.c.h.b16 %v116
  %v257 = vunpack.c.l.b16 %v117
  %v258 = vunpack.c.h.b16 %v117
  %v259 = vunpack.c.l.b16 %v118
  %v260 = vunpack.c.h.b16 %v118
  %v261 = vunpack.c.l.b16 %v119
  %v262 = vunpack.c.h.b16 %v119
  %v263 = vunpack.c.l.b16 %v120
  %v264 = vunpack.c.h.b16 %v120
  %v265 = vunpack.c.l.b16 %v121
  %v266 = vunpack.c.h.b16 %v121
  %v267 = vunpack.c.l.b16 %v122
  %v268 = vunpack.c.h.b16 %v122
  %v269 = vunpack.c.l.b16 %v123
  %v270 = vunpack.c.h.b16 %v123
  %v271 = vunpack.c.l.b16 %v124
  %v272 = vunpack.c.h.b16 %v124
  %v273 = vunpack.c.l.b16 %v125
  %v274 = vunpack.c.h.b16 %v125
  %v275 = vunpack.c.l.b16 %v126
  %v276 = vunpack.c.h.b16 %v126
  %v277 = vunpack.c.l.b16 %v127
  %v278 = vunpack.c.h.b16 %v127
  %v279 = vunpack.c.l.b16 %v128
  %v280 = vunpack.c.h.b16 %v128
  %v281 = vunpack.c.l.b16 %v129
  %v282 = vunpack.c.h.b16 %v129
  %v283 = vunpack.c.l.b16 %v130
  %v284 = vunpack.c.h.b16 %v130
  %v285 = vunpack.c.l.b16 %v131
  %v286 = vunpack.c.h.b16 %v131
  %v287 = vunpack.c.l.b16 %v132
  %v288 = vunpack.c.h.b16 %v132
  %v289 = vunpack.c.l.b16 %v133
  %v290 = vunpack.c.h.b16 %v133
  %v291 = vunpack.c.l.b16 %v134
  %v292 = vunpack.c.h.b16 %v134
  %v293 = vunpack.c.l.b16 %v135
  %v294 = vunpack.c.h.b16 %v135
  %v295 = vunpack.c.l.b16 %v136
  %v296 = vunpack.c.h.b16 %v136
  %v297 = vunpack.c.l.b16 %v137
  %v298 = vunpack.c.h.b16 %v137
  %v299 = vunpack.c.l.b16 %v138
  %v300 = vunpack.c.h.b16 %v138
  %v301 = vunpack.c.l.b16 %v139
  %v302 = vunpack.c.h.b16 %v139
  %v303 = vunpack.c.l.b16 %v140
  %v304 = vunpack.c.h.b16 %v140
  %v305 = vunpack.c.l.b16 %v141
  %v306 = vunpack.c.h.b16 %v141
  %v307 = vunpack.c.l.b16 %v142
  %v308 = vunpack.c.h.b16 %v142
  %v309 = vunpack.c.l.b16 %v143
  %v310 = vunpack.c.h.b16 %v143
  %v311 = vunpack.c.l.b16 %v144
  %v312 = vunpack.c.h.b16 %v144
  %v313 = vunpack.c.l.b16 %v145
  %v314 = vunpack.c.h.b16 %v145
  %v315 = vunpack.c.l.b16 %v146
  %v316 = vunpack.c.h.b16 %v146
  %v317 = vunpack.c.l.b16 %v147
  %v318 = vunpack.c.h.b16 %v147
  %v319 = vunpack.c.l.b16 %v148
  %v320 = vunpack.c.h.b16 %v148
  %v321 = vunpack.c.l.b16 %v149
  %v322 = vunpack.c.h.b16 %v149
  %v323 = vunpack.c.l.b16 %v150
  %v324 = vunpack.c.h.b16 %v150
  %v325 = vunpack.c.l.b16 %v151
  %v326 = vunpack.c.h.b16 %v151
  %v327 = vunpack.c.l.b16 %v152
  %v328 = vunpack.c.h.b16 %v152
  %v329 = vunpack.c.l.b16 %v153
  %v330 = vunpack.c.h.b16 %v153
  %v331 = vunpack.c.l.b16 %v154
  %v332 = vunpack.c.h.b16 %v154
  %v333 = vunpack.c.l.b16 %v155
  %v334 = vunpack.c.h.b16 %v155
  %v335 = vunpack.c.l.b16 %v156
  %v336 = vunpack.c.h.b16 %v156
  %v337 = vunpack.c.l.b16 %v157
  %v338 = vunpack.c.h.b16 %v157
  %v339 = vunpack.c.l.b16 %v158
  %v340 = vunpack.c.h.b16 %v158
  %v341 = vunpack.c.l.b16 %v159
  %v342 = vunpack.c.h.b16 %v159
  %v343 = vunpack.c.l.b16 %v160
  %v344 = vunpack.c.h.b16 %v160
  %v345 = vunpack.c.l.b16 %v161
  %v346 = vunpack.c.h.b16 %v161
  %v347 = vunpack.c.l.b16 %v162
  %v348 = vunpack.c.h.b16 %v162
  %v349 = vunpack.c.l.b16 %v163
  %v350 = vunpack.c.h.b16 %v163
  %v351 = vunpack.c.l.b16 %v164
  %v352 = vunpack.c.h.b16 %v164
  %v353 = vunpack.c.l.b16 %v165
  %v354 = vunpack.c.h.b16 %v165
  %v355 = vunpack.c.l.b16 %v166
  %v356 = vunpack.c.h.b16 %v166
  %v357 = vunpack.c.l.b16 %v167
  %v358 = vunpack.c.h.b16 %v167
  %v359 = vunpack.c.l.b16 %v168
  %v360 = vunpack.c.h.b16 %v168
  %v361 = vunpack.c.l.b16 %v169
  %v362 = vunpack.c.h.b16 %v169
  %v363 = vunpack.c.l.b16 %v170
  %v364 = vunpack.c.h.b16 %v170
  %v365 = vunpack.c.l.b16 %v171
  %v366 = vunpack.c.h.b16 %v171
  %v367 = vunpack.c.l.b16 %v172
  %v368 = vunpack.c.h.b16 %v172
  %v369 = vunpack.c.l.b16 %v173
  %v370 = vunpack.c.h.b16 %v173
  %v371 = vunpack.c.l.b16 %v174
  %v372 = vunpack.c.h.b16 %v174
  %v373 = vunpack.c.l.b16 %v175
  %v374 = vunpack.c.h.b16 %v175
  %v375 = vpack.c.b16 %v251, %v247
  %v376 = vpack.c.b16 %v252, %v248
  %v377 = vpack.c.b16 %v253, %v249
  %v378 = vpack.c.b16 %v254, %v250
  %v379 = vpack.c.b16 %v259, %v255
  %v380 = vpack.c.b16 %v260, %v256
  %v381 = vpack.c.b16 %v261, %v257
  %v382 = vpack.c.b16 %v262, %v258
  %v383 = vpack.c.b16 %v267, %v263
  %v384 = vpack.c.b16 %v268, %v264
  %v385 = vpack.c.b16 %v269, %v265
  %v386 = vpack.c.b16 %v270, %v266
  %v387 = vpack.c.b16 %v275, %v271
  %v388 = vpack.c.b16 %v276, %v272
  %v389 = vpack.c.b16 %v277, %v273
  %v390 = vpack.c.b16 %v278, %v274
  %v391 = vpack.c.b16 %v283, %v279
  %v392 = vpack.c.b16 %v284, %v280
  %v393 = vpack.c.b16 %v285, %v281
  %v394 = vpack.c.b16 %v286, %v282
  %v395 = vpack.c.b16 %v291, %v287
  %v396 = vpack.c.b16 %v292, %v288
  %v397 = vpack.c.b16 %v293, %v289
  %v398 = vpack.c.b16 %v294, %v290
  %v399 = vpack.c.b16 %v299, %v295
  %v400 = vpack.c.b16 %v300, %v296
  %v401 = vpack.c.b16 %v301, %v297
  %v402 = vpack.c.b16 %v302, %v298
  %v403 = vpack.c.b16 %v307, %v303
  %v404 = vpack.c.b16 %v308, %v304
  %v405 = vpack.c.b16 %v309, %v305
  %v406 = vpack.c.b16 %v310, %v306
  %v407 = vpack.c.b16 %v315, %v311
  %v408 = vpack.c.b16 %v316, %v312
  %v409 = vpack.c.b16 %v317, %v313
  %v410 = vpack.c.b16 %v318, %v314
  %v411 = vpack.c.b16 %v323, %v319
  %v412 = vpack.c.b16 %v324, %v320
  %v413 = vpack.c.b16 %v325, %v321
  %v414 = vpack.c.b16 %v326, %v322
  %v415 = vpack.c.b16 %v331, %v327
  %v416 = vpack.c.b16 %v332, %v328
  %v417 = vpack.c.b16 %v333, %v329
  %v418 = vpack.c.b16 %v334, %v330
  %v419 = vpack.c.b16 %v339, %v335
  %v420 = vpack.c.b16 %v340, %v336
  %v421 = vpack.c.b16 %v341, %v337
  %v422 = vpack.c.b16 %v342, %v338
  %v423 = vpack.c.b16 %v347, %v343
  %v424 = vpack.c.b16 %v348, %v344
  %v425 = vpack.c.b16 %v349, %v345
  %v426 = vpack.c.b16 %v350, %v346
  %v427 = vpack.c.b16 %v355, %v351
  %v428 = vpack.c.b16 %v356, %v352
  %v429 = vpack.c.b16 %v357, %v353
  %v430 = vpack.c.b16 %v358, %v354
  %v431 = vpack.c.b16 %v363, %v359
  %v432 = vpack.c.b16 %v364, %v360
  %v433 = vpack.c.b16 %v365, %v361
  %v434 = vpack.c.b16 %v366, %v362
  %v435 = vpack.c.b16 %v371, %v367
  %v436 = vpack.c.b16 %v372, %v368
  %v437 = vpack.c.b16 %v373, %v369
  %v438 = vpack.c.b16 %v374, %v370
  %503 = vmatprep.subr.bf16.mxu0 %v376
  %504 = vmatpush1.bf16.msra.mxu0 %v375
  %505 = vmatprep.subr.bf16.mxu0 %v380
  %506 = vmatpush1.bf16.msra.mxu0 %v379
  %507 = vmatprep.subr.bf16.mxu0 %v384
  %508 = vmatpush1.bf16.msra.mxu0 %v383
  %509 = vmatprep.subr.bf16.mxu0 %v388
  %510 = vmatpush1.bf16.msra.mxu0 %v387
  %511 = vmatprep.subr.bf16.mxu0 %v392
  %512 = vmatpush1.bf16.msra.mxu0 %v391
  %513 = vmatprep.subr.bf16.mxu0 %v396
  %514 = vmatpush1.bf16.msra.mxu0 %v395
  %515 = vmatprep.subr.bf16.mxu0 %v400
  %516 = vmatpush1.bf16.msra.mxu0 %v399
  %517 = vmatprep.subr.bf16.mxu0 %v404
  %518 = vmatpush1.bf16.msra.mxu0 %v403
  %519 = vmatprep.subr.bf16.mxu0 %v408
  %520 = vmatpush1.bf16.msra.mxu0 %v407
  %521 = vmatprep.subr.bf16.mxu0 %v412
  %522 = vmatpush1.bf16.msra.mxu0 %v411
  %523 = vmatprep.subr.bf16.mxu0 %v416
  %524 = vmatpush1.bf16.msra.mxu0 %v415
  %525 = vmatprep.subr.bf16.mxu0 %v420
  %526 = vmatpush1.bf16.msra.mxu0 %v419
  %527 = vmatprep.subr.bf16.mxu0 %v424
  %528 = vmatpush1.bf16.msra.mxu0 %v423
  %529 = vmatprep.subr.bf16.mxu0 %v428
  %530 = vmatpush1.bf16.msra.mxu0 %v427
  %531 = vmatprep.subr.bf16.mxu0 %v432
  %532 = vmatpush1.bf16.msra.mxu0 %v431
  %533 = vmatprep.subr.bf16.mxu0 %v436
  %534 = vmatpush1.bf16.msra.mxu0 %v435
  %535 = vmatprep.mubr.bf16.mxu0 %v180
  %536 = vmatmul.mubr.bf16.gmra.mrb[0].mxu0 %v179
  %v537 = vpop.f32.mrb[0].mxu0
  %v538 = vadd.f32 0.0, %v537
  %v539 = vpop.f32.mrb[0].mxu0
  %v540 = vadd.f32 0.0, %v539
  %v541 = vpop.f32.mrb[0].mxu0
  %v542 = vpop.f32.mrb[0].mxu0
  %543 = vdwg.mxu0
  %544 = vmatprep.subr.bf16.mxu0 %v378
  %545 = vmatpush1.bf16.msra.mxu0 %v377
  %546 = vmatprep.subr.bf16.mxu0 %v382
  %547 = vmatpush1.bf16.msra.mxu0 %v381
  %548 = vmatprep.subr.bf16.mxu0 %v386
  %549 = vmatpush1.bf16.msra.mxu0 %v385
  %550 = vmatprep.subr.bf16.mxu0 %v390
  %551 = vmatpush1.bf16.msra.mxu0 %v389
  %552 = vmatprep.subr.bf16.mxu0 %v394
  %553 = vmatpush1.bf16.msra.mxu0 %v393
  %554 = vmatprep.subr.bf16.mxu0 %v398
  %555 = vmatpush1.bf16.msra.mxu0 %v397
  %556 = vmatprep.subr.bf16.mxu0 %v402
  %557 = vmatpush1.bf16.msra.mxu0 %v401
  %558 = vmatprep.subr.bf16.mxu0 %v406
  %559 = vmatpush1.bf16.msra.mxu0 %v405
  %560 = vmatprep.subr.bf16.mxu0 %v410
  %561 = vmatpush1.bf16.msra.mxu0 %v409
  %562 = vmatprep.subr.bf16.mxu0 %v414
  %563 = vmatpush1.bf16.msra.mxu0 %v413
  %564 = vmatprep.subr.bf16.mxu0 %v418
  %565 = vmatpush1.bf16.msra.mxu0 %v417
  %566 = vmatprep.subr.bf16.mxu0 %v422
  %567 = vmatpush1.bf16.msra.mxu0 %v421
  %568 = vmatprep.subr.bf16.mxu0 %v426
  %569 = vmatpush1.bf16.msra.mxu0 %v425
  %570 = vmatprep.subr.bf16.mxu0 %v430
  %571 = vmatpush1.bf16.msra.mxu0 %v429
  %572 = vmatprep.subr.bf16.mxu0 %v434
  %573 = vmatpush1.bf16.msra.mxu0 %v433
  %574 = vmatprep.subr.bf16.mxu0 %v438
  %575 = vmatpush1.bf16.msra.mxu0 %v437
  %576 = vmatprep.mubr.bf16.mxu0 %v180
  %577 = vmatmul.mubr.bf16.gmra.mrb[0].mxu0 %v179
  %v578 = vpop.f32.mrb[0].mxu0
  %v579 = vadd.f32 0.0, %v578
  %v580 = vpop.f32.mrb[0].mxu0
  %v581 = vadd.f32 0.0, %v580
  %v582 = vpop.f32.mrb[0].mxu0
  %v583 = vpop.f32.mrb[0].mxu0
  %584 = vdwg.mxu0
  %v585 = vmax.f32 %v538, %v579
  %v586 = vmax.f32 %v540, %v581
  %v587 = vld [vmem:[%s3] sm:$0x3]
  %v589 = vlaneseq
  %v590 = vshrl.u32 %v589, 7
  %v591 = vsub.s32 0, %v590
  %v592 = vrot.slane %v587, %v591
  %v593 = vlaneseq
  %v594 = vshrl.u32 %v593, 7
  %v595 = vsub.s32 1, %v594
  %v596 = vrot.slane %v587, %v595
  %v599 = vadd.f32 %v585, %v592
  %v600 = vadd.f32 %v586, %v596
  %v601 = vpack.c.bf16 %v599, %v599
  %v602 = vpack.c.bf16 %v600, %v600
  %v603 = vld [vmem:[%s4] sm:$0xff]
  %v604 = vld [vmem:[%s4 + $0x8] sm:$0xff]
  %v605 = vld [vmem:[%s4 + $0x10] sm:$0xff]
  %v606 = vld [vmem:[%s4 + $0x18] sm:$0xff]
  %v607 = vld [vmem:[%s4 + $0x20] sm:$0xff]
  %v608 = vld [vmem:[%s4 + $0x28] sm:$0xff]
  %v609 = vld [vmem:[%s4 + $0x30] sm:$0xff]
  %v610 = vld [vmem:[%s4 + $0x38] sm:$0xff]
  %v611 = vld [vmem:[%s4 + $0x40] sm:$0xff]
  %v612 = vld [vmem:[%s4 + $0x48] sm:$0xff]
  %v613 = vld [vmem:[%s4 + $0x50] sm:$0xff]
  %v614 = vld [vmem:[%s4 + $0x58] sm:$0xff]
  %v615 = vld [vmem:[%s4 + $0x60] sm:$0xff]
  %v616 = vld [vmem:[%s4 + $0x68] sm:$0xff]
  %v617 = vld [vmem:[%s4 + $0x70] sm:$0xff]
  %v618 = vld [vmem:[%s4 + $0x78] sm:$0xff]
  %v619 = vld [vmem:[%s4 + $0x80] sm:$0xff]
  %v620 = vld [vmem:[%s4 + $0x88] sm:$0xff]
  %v621 = vld [vmem:[%s4 + $0x90] sm:$0xff]
  %v622 = vld [vmem:[%s4 + $0x98] sm:$0xff]
  %v623 = vld [vmem:[%s4 + $0xa0] sm:$0xff]
  %v624 = vld [vmem:[%s4 + $0xa8] sm:$0xff]
  %v625 = vld [vmem:[%s4 + $0xb0] sm:$0xff]
  %v626 = vld [vmem:[%s4 + $0xb8] sm:$0xff]
  %v627 = vld [vmem:[%s4 + $0xc0] sm:$0xff]
  %v628 = vld [vmem:[%s4 + $0xc8] sm:$0xff]
  %v629 = vld [vmem:[%s4 + $0xd0] sm:$0xff]
  %v630 = vld [vmem:[%s4 + $0xd8] sm:$0xff]
  %v631 = vld [vmem:[%s4 + $0xe0] sm:$0xff]
  %v632 = vld [vmem:[%s4 + $0xe8] sm:$0xff]
  %v633 = vld [vmem:[%s4 + $0xf0] sm:$0xff]
  %v634 = vld [vmem:[%s4 + $0xf8] sm:$0xff]
  %v635 = vld [vmem:[%s4 + $0x100] sm:$0xff]
  %v636 = vld [vmem:[%s4 + $0x108] sm:$0xff]
  %v637 = vld [vmem:[%s4 + $0x110] sm:$0xff]
  %v638 = vld [vmem:[%s4 + $0x118] sm:$0xff]
  %v639 = vld [vmem:[%s4 + $0x120] sm:$0xff]
  %v640 = vld [vmem:[%s4 + $0x128] sm:$0xff]
  %v641 = vld [vmem:[%s4 + $0x130] sm:$0xff]
  %v642 = vld [vmem:[%s4 + $0x138] sm:$0xff]
  %v643 = vld [vmem:[%s4 + $0x140] sm:$0xff]
  %v644 = vld [vmem:[%s4 + $0x148] sm:$0xff]
  %v645 = vld [vmem:[%s4 + $0x150] sm:$0xff]
  %v646 = vld [vmem:[%s4 + $0x158] sm:$0xff]
  %v647 = vld [vmem:[%s4 + $0x160] sm:$0xff]
  %v648 = vld [vmem:[%s4 + $0x168] sm:$0xff]
  %v649 = vld [vmem:[%s4 + $0x170] sm:$0xff]
  %v650 = vld [vmem:[%s4 + $0x178] sm:$0xff]
  %v651 = vld [vmem:[%s4 + $0x180] sm:$0xff]
  %v652 = vld [vmem:[%s4 + $0x188] sm:$0xff]
  %v653 = vld [vmem:[%s4 + $0x190] sm:$0xff]
  %v654 = vld [vmem:[%s4 + $0x198] sm:$0xff]
  %v655 = vld [vmem:[%s4 + $0x1a0] sm:$0xff]
  %v656 = vld [vmem:[%s4 + $0x1a8] sm:$0xff]
  %v657 = vld [vmem:[%s4 + $0x1b0] sm:$0xff]
  %v658 = vld [vmem:[%s4 + $0x1b8] sm:$0xff]
  %v659 = vld [vmem:[%s4 + $0x1c0] sm:$0xff]
  %v660 = vld [vmem:[%s4 + $0x1c8] sm:$0xff]
  %v661 = vld [vmem:[%s4 + $0x1d0] sm:$0xff]
  %v662 = vld [vmem:[%s4 + $0x1d8] sm:$0xff]
  %v663 = vld [vmem:[%s4 + $0x1e0] sm:$0xff]
  %v664 = vld [vmem:[%s4 + $0x1e8] sm:$0xff]
  %v665 = vld [vmem:[%s4 + $0x1f0] sm:$0xff]
  %v666 = vld [vmem:[%s4 + $0x1f8] sm:$0xff]
  %v667 = vld [vmem:[%s4 + $0x200] sm:$0xff]
  %v668 = vld [vmem:[%s4 + $0x208] sm:$0xff]
  %v669 = vld [vmem:[%s4 + $0x210] sm:$0xff]
  %v670 = vld [vmem:[%s4 + $0x218] sm:$0xff]
  %v671 = vld [vmem:[%s4 + $0x220] sm:$0xff]
  %v672 = vld [vmem:[%s4 + $0x228] sm:$0xff]
  %v673 = vld [vmem:[%s4 + $0x230] sm:$0xff]
  %v674 = vld [vmem:[%s4 + $0x238] sm:$0xff]
  %v675 = vld [vmem:[%s4 + $0x240] sm:$0xff]
  %v676 = vld [vmem:[%s4 + $0x248] sm:$0xff]
  %v677 = vld [vmem:[%s4 + $0x250] sm:$0xff]
  %v678 = vld [vmem:[%s4 + $0x258] sm:$0xff]
  %v679 = vld [vmem:[%s4 + $0x260] sm:$0xff]
  %v680 = vld [vmem:[%s4 + $0x268] sm:$0xff]
  %v681 = vld [vmem:[%s4 + $0x270] sm:$0xff]
  %v682 = vld [vmem:[%s4 + $0x278] sm:$0xff]
  %v683 = vld [vmem:[%s4 + $0x280] sm:$0xff]
  %v684 = vld [vmem:[%s4 + $0x288] sm:$0xff]
  %v685 = vld [vmem:[%s4 + $0x290] sm:$0xff]
  %v686 = vld [vmem:[%s4 + $0x298] sm:$0xff]
  %v687 = vld [vmem:[%s4 + $0x2a0] sm:$0xff]
  %v688 = vld [vmem:[%s4 + $0x2a8] sm:$0xff]
  %v689 = vld [vmem:[%s4 + $0x2b0] sm:$0xff]
  %v690 = vld [vmem:[%s4 + $0x2b8] sm:$0xff]
  %v691 = vld [vmem:[%s4 + $0x2c0] sm:$0xff]
  %v692 = vld [vmem:[%s4 + $0x2c8] sm:$0xff]
  %v693 = vld [vmem:[%s4 + $0x2d0] sm:$0xff]
  %v694 = vld [vmem:[%s4 + $0x2d8] sm:$0xff]
  %v695 = vld [vmem:[%s4 + $0x2e0] sm:$0xff]
  %v696 = vld [vmem:[%s4 + $0x2e8] sm:$0xff]
  %v697 = vld [vmem:[%s4 + $0x2f0] sm:$0xff]
  %v698 = vld [vmem:[%s4 + $0x2f8] sm:$0xff]
  %v699 = vld [vmem:[%s4 + $0x300] sm:$0xff]
  %v700 = vld [vmem:[%s4 + $0x308] sm:$0xff]
  %v701 = vld [vmem:[%s4 + $0x310] sm:$0xff]
  %v702 = vld [vmem:[%s4 + $0x318] sm:$0xff]
  %v703 = vld [vmem:[%s4 + $0x320] sm:$0xff]
  %v704 = vld [vmem:[%s4 + $0x328] sm:$0xff]
  %v705 = vld [vmem:[%s4 + $0x330] sm:$0xff]
  %v706 = vld [vmem:[%s4 + $0x338] sm:$0xff]
  %v707 = vld [vmem:[%s4 + $0x340] sm:$0xff]
  %v708 = vld [vmem:[%s4 + $0x348] sm:$0xff]
  %v709 = vld [vmem:[%s4 + $0x350] sm:$0xff]
  %v710 = vld [vmem:[%s4 + $0x358] sm:$0xff]
  %v711 = vld [vmem:[%s4 + $0x360] sm:$0xff]
  %v712 = vld [vmem:[%s4 + $0x368] sm:$0xff]
  %v713 = vld [vmem:[%s4 + $0x370] sm:$0xff]
  %v714 = vld [vmem:[%s4 + $0x378] sm:$0xff]
  %v715 = vld [vmem:[%s4 + $0x380] sm:$0xff]
  %v716 = vld [vmem:[%s4 + $0x388] sm:$0xff]
  %v717 = vld [vmem:[%s4 + $0x390] sm:$0xff]
  %v718 = vld [vmem:[%s4 + $0x398] sm:$0xff]
  %v719 = vld [vmem:[%s4 + $0x3a0] sm:$0xff]
  %v720 = vld [vmem:[%s4 + $0x3a8] sm:$0xff]
  %v721 = vld [vmem:[%s4 + $0x3b0] sm:$0xff]
  %v722 = vld [vmem:[%s4 + $0x3b8] sm:$0xff]
  %v723 = vld [vmem:[%s4 + $0x3c0] sm:$0xff]
  %v724 = vld [vmem:[%s4 + $0x3c8] sm:$0xff]
  %v725 = vld [vmem:[%s4 + $0x3d0] sm:$0xff]
  %v726 = vld [vmem:[%s4 + $0x3d8] sm:$0xff]
  %v727 = vld [vmem:[%s4 + $0x3e0] sm:$0xff]
  %v728 = vld [vmem:[%s4 + $0x3e8] sm:$0xff]
  %v729 = vld [vmem:[%s4 + $0x3f0] sm:$0xff]
  %v730 = vld [vmem:[%s4 + $0x3f8] sm:$0xff]
  %v731 = vld [vmem:[%s5] sm:$0xff]
  %v733 = vlaneseq
  %v734 = vshrl.u32 %v733, 7
  %v735 = vsub.s32 0, %v734
  %v736 = vrot.slane %v731, %v735
  %v737 = vlaneseq
  %v738 = vshrl.u32 %v737, 7
  %v739 = vsub.s32 1, %v738
  %v740 = vrot.slane %v731, %v739
  %v741 = vlaneseq
  %v742 = vshrl.u32 %v741, 7
  %v743 = vsub.s32 2, %v742
  %v744 = vrot.slane %v731, %v743
  %v745 = vlaneseq
  %v746 = vshrl.u32 %v745, 7
  %v747 = vsub.s32 3, %v746
  %v748 = vrot.slane %v731, %v747
  %v749 = vlaneseq
  %v750 = vshrl.u32 %v749, 7
  %v751 = vsub.s32 4, %v750
  %v752 = vrot.slane %v731, %v751
  %v753 = vlaneseq
  %v754 = vshrl.u32 %v753, 7
  %v755 = vsub.s32 5, %v754
  %v756 = vrot.slane %v731, %v755
  %v757 = vlaneseq
  %v758 = vshrl.u32 %v757, 7
  %v759 = vsub.s32 6, %v758
  %v760 = vrot.slane %v731, %v759
  %v761 = vlaneseq
  %v762 = vshrl.u32 %v761, 7
  %v763 = vsub.s32 7, %v762
  %v764 = vrot.slane %v731, %v763
  %v901 = vunpack.c.l.b16 %v603
  %v902 = vunpack.c.h.b16 %v603
  %v903 = vunpack.c.l.b16 %v604
  %v904 = vunpack.c.h.b16 %v604
  %v905 = vunpack.c.l.b16 %v605
  %v906 = vunpack.c.h.b16 %v605
  %v907 = vunpack.c.l.b16 %v606
  %v908 = vunpack.c.h.b16 %v606
  %v909 = vunpack.c.l.b16 %v607
  %v910 = vunpack.c.h.b16 %v607
  %v911 = vunpack.c.l.b16 %v608
  %v912 = vunpack.c.h.b16 %v608
  %v913 = vunpack.c.l.b16 %v609
  %v914 = vunpack.c.h.b16 %v609
  %v915 = vunpack.c.l.b16 %v610
  %v916 = vunpack.c.h.b16 %v610
  %v917 = vunpack.c.l.b16 %v611
  %v918 = vunpack.c.h.b16 %v611
  %v919 = vunpack.c.l.b16 %v612
  %v920 = vunpack.c.h.b16 %v612
  %v921 = vunpack.c.l.b16 %v613
  %v922 = vunpack.c.h.b16 %v613
  %v923 = vunpack.c.l.b16 %v614
  %v924 = vunpack.c.h.b16 %v614
  %v925 = vunpack.c.l.b16 %v615
  %v926 = vunpack.c.h.b16 %v615
  %v927 = vunpack.c.l.b16 %v616
  %v928 = vunpack.c.h.b16 %v616
  %v929 = vunpack.c.l.b16 %v617
  %v930 = vunpack.c.h.b16 %v617
  %v931 = vunpack.c.l.b16 %v618
  %v932 = vunpack.c.h.b16 %v618
  %v933 = vunpack.c.l.b16 %v619
  %v934 = vunpack.c.h.b16 %v619
  %v935 = vunpack.c.l.b16 %v620
  %v936 = vunpack.c.h.b16 %v620
  %v937 = vunpack.c.l.b16 %v621
  %v938 = vunpack.c.h.b16 %v621
  %v939 = vunpack.c.l.b16 %v622
  %v940 = vunpack.c.h.b16 %v622
  %v941 = vunpack.c.l.b16 %v623
  %v942 = vunpack.c.h.b16 %v623
  %v943 = vunpack.c.l.b16 %v624
  %v944 = vunpack.c.h.b16 %v624
  %v945 = vunpack.c.l.b16 %v625
  %v946 = vunpack.c.h.b16 %v625
  %v947 = vunpack.c.l.b16 %v626
  %v948 = vunpack.c.h.b16 %v626
  %v949 = vunpack.c.l.b16 %v627
  %v950 = vunpack.c.h.b16 %v627
  %v951 = vunpack.c.l.b16 %v628
  %v952 = vunpack.c.h.b16 %v628
  %v953 = vunpack.c.l.b16 %v629
  %v954 = vunpack.c.h.b16 %v629
  %v955 = vunpack.c.l.b16 %v630
  %v956 = vunpack.c.h.b16 %v630
  %v957 = vunpack.c.l.b16 %v631
  %v958 = vunpack.c.h.b16 %v631
  %v959 = vunpack.c.l.b16 %v632
  %v960 = vunpack.c.h.b16 %v632
  %v961 = vunpack.c.l.b16 %v633
  %v962 = vunpack.c.h.b16 %v633
  %v963 = vunpack.c.l.b16 %v634
  %v964 = vunpack.c.h.b16 %v634
  %v965 = vunpack.c.l.b16 %v635
  %v966 = vunpack.c.h.b16 %v635
  %v967 = vunpack.c.l.b16 %v636
  %v968 = vunpack.c.h.b16 %v636
  %v969 = vunpack.c.l.b16 %v637
  %v970 = vunpack.c.h.b16 %v637
  %v971 = vunpack.c.l.b16 %v638
  %v972 = vunpack.c.h.b16 %v638
  %v973 = vunpack.c.l.b16 %v639
  %v974 = vunpack.c.h.b16 %v639
  %v975 = vunpack.c.l.b16 %v640
  %v976 = vunpack.c.h.b16 %v640
  %v977 = vunpack.c.l.b16 %v641
  %v978 = vunpack.c.h.b16 %v641
  %v979 = vunpack.c.l.b16 %v642
  %v980 = vunpack.c.h.b16 %v642
  %v981 = vunpack.c.l.b16 %v643
  %v982 = vunpack.c.h.b16 %v643
  %v983 = vunpack.c.l.b16 %v644
  %v984 = vunpack.c.h.b16 %v644
  %v985 = vunpack.c.l.b16 %v645
  %v986 = vunpack.c.h.b16 %v645
  %v987 = vunpack.c.l.b16 %v646
  %v988 = vunpack.c.h.b16 %v646
  %v989 = vunpack.c.l.b16 %v647
  %v990 = vunpack.c.h.b16 %v647
  %v991 = vunpack.c.l.b16 %v648
  %v992 = vunpack.c.h.b16 %v648
  %v993 = vunpack.c.l.b16 %v649
  %v994 = vunpack.c.h.b16 %v649
  %v995 = vunpack.c.l.b16 %v650
  %v996 = vunpack.c.h.b16 %v650
  %v997 = vunpack.c.l.b16 %v651
  %v998 = vunpack.c.h.b16 %v651
  %v999 = vunpack.c.l.b16 %v652
  %v1000 = vunpack.c.h.b16 %v652
  %v1001 = vunpack.c.l.b16 %v653
  %v1002 = vunpack.c.h.b16 %v653
  %v1003 = vunpack.c.l.b16 %v654
  %v1004 = vunpack.c.h.b16 %v654
  %v1005 = vunpack.c.l.b16 %v655
  %v1006 = vunpack.c.h.b16 %v655
  %v1007 = vunpack.c.l.b16 %v656
  %v1008 = vunpack.c.h.b16 %v656
  %v1009 = vunpack.c.l.b16 %v657
  %v1010 = vunpack.c.h.b16 %v657
  %v1011 = vunpack.c.l.b16 %v658
  %v1012 = vunpack.c.h.b16 %v658
  %v1013 = vunpack.c.l.b16 %v659
  %v1014 = vunpack.c.h.b16 %v659
  %v1015 = vunpack.c.l.b16 %v660
  %v1016 = vunpack.c.h.b16 %v660
  %v1017 = vunpack.c.l.b16 %v661
  %v1018 = vunpack.c.h.b16 %v661
  %v1019 = vunpack.c.l.b16 %v662
  %v1020 = vunpack.c.h.b16 %v662
  %v1021 = vunpack.c.l.b16 %v663
  %v1022 = vunpack.c.h.b16 %v663
  %v1023 = vunpack.c.l.b16 %v664
  %v1024 = vunpack.c.h.b16 %v664
  %v1025 = vunpack.c.l.b16 %v665
  %v1026 = vunpack.c.h.b16 %v665
  %v1027 = vunpack.c.l.b16 %v666
  %v1028 = vunpack.c.h.b16 %v666
  %v1029 = vunpack.c.l.b16 %v667
  %v1030 = vunpack.c.h.b16 %v667
  %v1031 = vunpack.c.l.b16 %v668
  %v1032 = vunpack.c.h.b16 %v668
  %v1033 = vunpack.c.l.b16 %v669
  %v1034 = vunpack.c.h.b16 %v669
  %v1035 = vunpack.c.l.b16 %v670
  %v1036 = vunpack.c.h.b16 %v670
  %v1037 = vunpack.c.l.b16 %v671
  %v1038 = vunpack.c.h.b16 %v671
  %v1039 = vunpack.c.l.b16 %v672
  %v1040 = vunpack.c.h.b16 %v672
  %v1041 = vunpack.c.l.b16 %v673
  %v1042 = vunpack.c.h.b16 %v673
  %v1043 = vunpack.c.l.b16 %v674
  %v1044 = vunpack.c.h.b16 %v674
  %v1045 = vunpack.c.l.b16 %v675
  %v1046 = vunpack.c.h.b16 %v675
  %v1047 = vunpack.c.l.b16 %v676
  %v1048 = vunpack.c.h.b16 %v676
  %v1049 = vunpack.c.l.b16 %v677
  %v1050 = vunpack.c.h.b16 %v677
  %v1051 = vunpack.c.l.b16 %v678
  %v1052 = vunpack.c.h.b16 %v678
  %v1053 = vunpack.c.l.b16 %v679
  %v1054 = vunpack.c.h.b16 %v679
  %v1055 = vunpack.c.l.b16 %v680
  %v1056 = vunpack.c.h.b16 %v680
  %v1057 = vunpack.c.l.b16 %v681
  %v1058 = vunpack.c.h.b16 %v681
  %v1059 = vunpack.c.l.b16 %v682
  %v1060 = vunpack.c.h.b16 %v682
  %v1061 = vunpack.c.l.b16 %v683
  %v1062 = vunpack.c.h.b16 %v683
  %v1063 = vunpack.c.l.b16 %v684
  %v1064 = vunpack.c.h.b16 %v684
  %v1065 = vunpack.c.l.b16 %v685
  %v1066 = vunpack.c.h.b16 %v685
  %v1067 = vunpack.c.l.b16 %v686
  %v1068 = vunpack.c.h.b16 %v686
  %v1069 = vunpack.c.l.b16 %v687
  %v1070 = vunpack.c.h.b16 %v687
  %v1071 = vunpack.c.l.b16 %v688
  %v1072 = vunpack.c.h.b16 %v688
  %v1073 = vunpack.c.l.b16 %v689
  %v1074 = vunpack.c.h.b16 %v689
  %v1075 = vunpack.c.l.b16 %v690
  %v1076 = vunpack.c.h.b16 %v690
  %v1077 = vunpack.c.l.b16 %v691
  %v1078 = vunpack.c.h.b16 %v691
  %v1079 = vunpack.c.l.b16 %v692
  %v1080 = vunpack.c.h.b16 %v692
  %v1081 = vunpack.c.l.b16 %v693
  %v1082 = vunpack.c.h.b16 %v693
  %v1083 = vunpack.c.l.b16 %v694
  %v1084 = vunpack.c.h.b16 %v694
  %v1085 = vunpack.c.l.b16 %v695
  %v1086 = vunpack.c.h.b16 %v695
  %v1087 = vunpack.c.l.b16 %v696
  %v1088 = vunpack.c.h.b16 %v696
  %v1089 = vunpack.c.l.b16 %v697
  %v1090 = vunpack.c.h.b16 %v697
  %v1091 = vunpack.c.l.b16 %v698
  %v1092 = vunpack.c.h.b16 %v698
  %v1093 = vunpack.c.l.b16 %v699
  %v1094 = vunpack.c.h.b16 %v699
  %v1095 = vunpack.c.l.b16 %v700
  %v1096 = vunpack.c.h.b16 %v700
  %v1097 = vunpack.c.l.b16 %v701
  %v1098 = vunpack.c.h.b16 %v701
  %v1099 = vunpack.c.l.b16 %v702
  %v1100 = vunpack.c.h.b16 %v702
  %v1101 = vunpack.c.l.b16 %v703
  %v1102 = vunpack.c.h.b16 %v703
  %v1103 = vunpack.c.l.b16 %v704
  %v1104 = vunpack.c.h.b16 %v704
  %v1105 = vunpack.c.l.b16 %v705
  %v1106 = vunpack.c.h.b16 %v705
  %v1107 = vunpack.c.l.b16 %v706
  %v1108 = vunpack.c.h.b16 %v706
  %v1109 = vunpack.c.l.b16 %v707
  %v1110 = vunpack.c.h.b16 %v707
  %v1111 = vunpack.c.l.b16 %v708
  %v1112 = vunpack.c.h.b16 %v708
  %v1113 = vunpack.c.l.b16 %v709
  %v1114 = vunpack.c.h.b16 %v709
  %v1115 = vunpack.c.l.b16 %v710
  %v1116 = vunpack.c.h.b16 %v710
  %v1117 = vunpack.c.l.b16 %v711
  %v1118 = vunpack.c.h.b16 %v711
  %v1119 = vunpack.c.l.b16 %v712
  %v1120 = vunpack.c.h.b16 %v712
  %v1121 = vunpack.c.l.b16 %v713
  %v1122 = vunpack.c.h.b16 %v713
  %v1123 = vunpack.c.l.b16 %v714
  %v1124 = vunpack.c.h.b16 %v714
  %v1125 = vunpack.c.l.b16 %v715
  %v1126 = vunpack.c.h.b16 %v715
  %v1127 = vunpack.c.l.b16 %v716
  %v1128 = vunpack.c.h.b16 %v716
  %v1129 = vunpack.c.l.b16 %v717
  %v1130 = vunpack.c.h.b16 %v717
  %v1131 = vunpack.c.l.b16 %v718
  %v1132 = vunpack.c.h.b16 %v718
  %v1133 = vunpack.c.l.b16 %v719
  %v1134 = vunpack.c.h.b16 %v719
  %v1135 = vunpack.c.l.b16 %v720
  %v1136 = vunpack.c.h.b16 %v720
  %v1137 = vunpack.c.l.b16 %v721
  %v1138 = vunpack.c.h.b16 %v721
  %v1139 = vunpack.c.l.b16 %v722
  %v1140 = vunpack.c.h.b16 %v722
  %v1141 = vunpack.c.l.b16 %v723
  %v1142 = vunpack.c.h.b16 %v723
  %v1143 = vunpack.c.l.b16 %v724
  %v1144 = vunpack.c.h.b16 %v724
  %v1145 = vunpack.c.l.b16 %v725
  %v1146 = vunpack.c.h.b16 %v725
  %v1147 = vunpack.c.l.b16 %v726
  %v1148 = vunpack.c.h.b16 %v726
  %v1149 = vunpack.c.l.b16 %v727
  %v1150 = vunpack.c.h.b16 %v727
  %v1151 = vunpack.c.l.b16 %v728
  %v1152 = vunpack.c.h.b16 %v728
  %v1153 = vunpack.c.l.b16 %v729
  %v1154 = vunpack.c.h.b16 %v729
  %v1155 = vunpack.c.l.b16 %v730
  %v1156 = vunpack.c.h.b16 %v730
  %v1157 = vpack.c.b16 %v909, %v901
  %v1158 = vpack.c.b16 %v910, %v902
  %v1159 = vpack.c.b16 %v911, %v903
  %v1160 = vpack.c.b16 %v912, %v904
  %v1161 = vpack.c.b16 %v913, %v905
  %v1162 = vpack.c.b16 %v914, %v906
  %v1163 = vpack.c.b16 %v915, %v907
  %v1164 = vpack.c.b16 %v916, %v908
  %v1165 = vpack.c.b16 %v925, %v917
  %v1166 = vpack.c.b16 %v926, %v918
  %v1167 = vpack.c.b16 %v927, %v919
  %v1168 = vpack.c.b16 %v928, %v920
  %v1169 = vpack.c.b16 %v929, %v921
  %v1170 = vpack.c.b16 %v930, %v922
  %v1171 = vpack.c.b16 %v931, %v923
  %v1172 = vpack.c.b16 %v932, %v924
  %v1173 = vpack.c.b16 %v941, %v933
  %v1174 = vpack.c.b16 %v942, %v934
  %v1175 = vpack.c.b16 %v943, %v935
  %v1176 = vpack.c.b16 %v944, %v936
  %v1177 = vpack.c.b16 %v945, %v937
  %v1178 = vpack.c.b16 %v946, %v938
  %v1179 = vpack.c.b16 %v947, %v939
  %v1180 = vpack.c.b16 %v948, %v940
  %v1181 = vpack.c.b16 %v957, %v949
  %v1182 = vpack.c.b16 %v958, %v950
  %v1183 = vpack.c.b16 %v959, %v951
  %v1184 = vpack.c.b16 %v960, %v952
  %v1185 = vpack.c.b16 %v961, %v953
  %v1186 = vpack.c.b16 %v962, %v954
  %v1187 = vpack.c.b16 %v963, %v955
  %v1188 = vpack.c.b16 %v964, %v956
  %v1189 = vpack.c.b16 %v973, %v965
  %v1190 = vpack.c.b16 %v974, %v966
  %v1191 = vpack.c.b16 %v975, %v967
  %v1192 = vpack.c.b16 %v976, %v968
  %v1193 = vpack.c.b16 %v977, %v969
  %v1194 = vpack.c.b16 %v978, %v970
  %v1195 = vpack.c.b16 %v979, %v971
  %v1196 = vpack.c.b16 %v980, %v972
  %v1197 = vpack.c.b16 %v989, %v981
  %v1198 = vpack.c.b16 %v990, %v982
  %v1199 = vpack.c.b16 %v991, %v983
  %v1200 = vpack.c.b16 %v992, %v984
  %v1201 = vpack.c.b16 %v993, %v985
  %v1202 = vpack.c.b16 %v994, %v986
  %v1203 = vpack.c.b16 %v995, %v987
  %v1204 = vpack.c.b16 %v996, %v988
  %v1205 = vpack.c.b16 %v1005, %v997
  %v1206 = vpack.c.b16 %v1006, %v998
  %v1207 = vpack.c.b16 %v1007, %v999
  %v1208 = vpack.c.b16 %v1008, %v1000
  %v1209 = vpack.c.b16 %v1009, %v1001
  %v1210 = vpack.c.b16 %v1010, %v1002
  %v1211 = vpack.c.b16 %v1011, %v1003
  %v1212 = vpack.c.b16 %v1012, %v1004
  %v1213 = vpack.c.b16 %v1021, %v1013
  %v1214 = vpack.c.b16 %v1022, %v1014
  %v1215 = vpack.c.b16 %v1023, %v1015
  %v1216 = vpack.c.b16 %v1024, %v1016
  %v1217 = vpack.c.b16 %v1025, %v1017
  %v1218 = vpack.c.b16 %v1026, %v1018
  %v1219 = vpack.c.b16 %v1027, %v1019
  %v1220 = vpack.c.b16 %v1028, %v1020
  %v1221 = vpack.c.b16 %v1037, %v1029
  %v1222 = vpack.c.b16 %v1038, %v1030
  %v1223 = vpack.c.b16 %v1039, %v1031
  %v1224 = vpack.c.b16 %v1040, %v1032
  %v1225 = vpack.c.b16 %v1041, %v1033
  %v1226 = vpack.c.b16 %v1042, %v1034
  %v1227 = vpack.c.b16 %v1043, %v1035
  %v1228 = vpack.c.b16 %v1044, %v1036
  %v1229 = vpack.c.b16 %v1053, %v1045
  %v1230 = vpack.c.b16 %v1054, %v1046
  %v1231 = vpack.c.b16 %v1055, %v1047
  %v1232 = vpack.c.b16 %v1056, %v1048
  %v1233 = vpack.c.b16 %v1057, %v1049
  %v1234 = vpack.c.b16 %v1058, %v1050
  %v1235 = vpack.c.b16 %v1059, %v1051
  %v1236 = vpack.c.b16 %v1060, %v1052
  %v1237 = vpack.c.b16 %v1069, %v1061
  %v1238 = vpack.c.b16 %v1070, %v1062
  %v1239 = vpack.c.b16 %v1071, %v1063
  %v1240 = vpack.c.b16 %v1072, %v1064
  %v1241 = vpack.c.b16 %v1073, %v1065
  %v1242 = vpack.c.b16 %v1074, %v1066
  %v1243 = vpack.c.b16 %v1075, %v1067
  %v1244 = vpack.c.b16 %v1076, %v1068
  %v1245 = vpack.c.b16 %v1085, %v1077
  %v1246 = vpack.c.b16 %v1086, %v1078
  %v1247 = vpack.c.b16 %v1087, %v1079
  %v1248 = vpack.c.b16 %v1088, %v1080
  %v1249 = vpack.c.b16 %v1089, %v1081
  %v1250 = vpack.c.b16 %v1090, %v1082
  %v1251 = vpack.c.b16 %v1091, %v1083
  %v1252 = vpack.c.b16 %v1092, %v1084
  %v1253 = vpack.c.b16 %v1101, %v1093
  %v1254 = vpack.c.b16 %v1102, %v1094
  %v1255 = vpack.c.b16 %v1103, %v1095
  %v1256 = vpack.c.b16 %v1104, %v1096
  %v1257 = vpack.c.b16 %v1105, %v1097
  %v1258 = vpack.c.b16 %v1106, %v1098
  %v1259 = vpack.c.b16 %v1107, %v1099
  %v1260 = vpack.c.b16 %v1108, %v1100
  %v1261 = vpack.c.b16 %v1117, %v1109
  %v1262 = vpack.c.b16 %v1118, %v1110
  %v1263 = vpack.c.b16 %v1119, %v1111
  %v1264 = vpack.c.b16 %v1120, %v1112
  %v1265 = vpack.c.b16 %v1121, %v1113
  %v1266 = vpack.c.b16 %v1122, %v1114
  %v1267 = vpack.c.b16 %v1123, %v1115
  %v1268 = vpack.c.b16 %v1124, %v1116
  %v1269 = vpack.c.b16 %v1133, %v1125
  %v1270 = vpack.c.b16 %v1134, %v1126
  %v1271 = vpack.c.b16 %v1135, %v1127
  %v1272 = vpack.c.b16 %v1136, %v1128
  %v1273 = vpack.c.b16 %v1137, %v1129
  %v1274 = vpack.c.b16 %v1138, %v1130
  %v1275 = vpack.c.b16 %v1139, %v1131
  %v1276 = vpack.c.b16 %v1140, %v1132
  %v1277 = vpack.c.b16 %v1149, %v1141
  %v1278 = vpack.c.b16 %v1150, %v1142
  %v1279 = vpack.c.b16 %v1151, %v1143
  %v1280 = vpack.c.b16 %v1152, %v1144
  %v1281 = vpack.c.b16 %v1153, %v1145
  %v1282 = vpack.c.b16 %v1154, %v1146
  %v1283 = vpack.c.b16 %v1155, %v1147
  %v1284 = vpack.c.b16 %v1156, %v1148
  %1413 = vmatprep.subr.bf16.mxu0 %v1158
  %1414 = vmatpush1.bf16.msra.mxu0 %v1157
  %1415 = vmatprep.subr.bf16.mxu0 %v1166
  %1416 = vmatpush1.bf16.msra.mxu0 %v1165
  %1417 = vmatprep.subr.bf16.mxu0 %v1174
  %1418 = vmatpush1.bf16.msra.mxu0 %v1173
  %1419 = vmatprep.subr.bf16.mxu0 %v1182
  %1420 = vmatpush1.bf16.msra.mxu0 %v1181
  %1421 = vmatprep.subr.bf16.mxu0 %v1190
  %1422 = vmatpush1.bf16.msra.mxu0 %v1189
  %1423 = vmatprep.subr.bf16.mxu0 %v1198
  %1424 = vmatpush1.bf16.msra.mxu0 %v1197
  %1425 = vmatprep.subr.bf16.mxu0 %v1206
  %1426 = vmatpush1.bf16.msra.mxu0 %v1205
  %1427 = vmatprep.subr.bf16.mxu0 %v1214
  %1428 = vmatpush1.bf16.msra.mxu0 %v1213
  %1429 = vmatprep.subr.bf16.mxu0 %v1222
  %1430 = vmatpush1.bf16.msra.mxu0 %v1221
  %1431 = vmatprep.subr.bf16.mxu0 %v1230
  %1432 = vmatpush1.bf16.msra.mxu0 %v1229
  %1433 = vmatprep.subr.bf16.mxu0 %v1238
  %1434 = vmatpush1.bf16.msra.mxu0 %v1237
  %1435 = vmatprep.subr.bf16.mxu0 %v1246
  %1436 = vmatpush1.bf16.msra.mxu0 %v1245
  %1437 = vmatprep.subr.bf16.mxu0 %v1254
  %1438 = vmatpush1.bf16.msra.mxu0 %v1253
  %1439 = vmatprep.subr.bf16.mxu0 %v1262
  %1440 = vmatpush1.bf16.msra.mxu0 %v1261
  %1441 = vmatprep.subr.bf16.mxu0 %v1270
  %1442 = vmatpush1.bf16.msra.mxu0 %v1269
  %1443 = vmatprep.subr.bf16.mxu0 %v1278
  %1444 = vmatpush1.bf16.msra.mxu0 %v1277
  %1445 = vmatprep.mubr.bf16.mxu0 %v602
  %1446 = vmatmul.mubr.bf16.gmra.mrb[0].mxu0 %v601
  %v1447 = vpop.f32.mrb[0].mxu0
  %v1448 = vadd.f32 %v736, %v1447
  %v1449 = vpop.f32.mrb[0].mxu0
  %v1450 = vadd.f32 %v740, %v1449
  %v1451 = vpop.f32.mrb[0].mxu0
  %v1452 = vpop.f32.mrb[0].mxu0
  %1453 = vdwg.mxu0
  %1454 = vmatprep.subr.bf16.mxu0 %v1160
  %1455 = vmatpush1.bf16.msra.mxu0 %v1159
  %1456 = vmatprep.subr.bf16.mxu0 %v1168
  %1457 = vmatpush1.bf16.msra.mxu0 %v1167
  %1458 = vmatprep.subr.bf16.mxu0 %v1176
  %1459 = vmatpush1.bf16.msra.mxu0 %v1175
  %1460 = vmatprep.subr.bf16.mxu0 %v1184
  %1461 = vmatpush1.bf16.msra.mxu0 %v1183
  %1462 = vmatprep.subr.bf16.mxu0 %v1192
  %1463 = vmatpush1.bf16.msra.mxu0 %v1191
  %1464 = vmatprep.subr.bf16.mxu0 %v1200
  %1465 = vmatpush1.bf16.msra.mxu0 %v1199
  %1466 = vmatprep.subr.bf16.mxu0 %v1208
  %1467 = vmatpush1.bf16.msra.mxu0 %v1207
  %1468 = vmatprep.subr.bf16.mxu0 %v1216
  %1469 = vmatpush1.bf16.msra.mxu0 %v1215
  %1470 = vmatprep.subr.bf16.mxu0 %v1224
  %1471 = vmatpush1.bf16.msra.mxu0 %v1223
  %1472 = vmatprep.subr.bf16.mxu0 %v1232
  %1473 = vmatpush1.bf16.msra.mxu0 %v1231
  %1474 = vmatprep.subr.bf16.mxu0 %v1240
  %1475 = vmatpush1.bf16.msra.mxu0 %v1239
  %1476 = vmatprep.subr.bf16.mxu0 %v1248
  %1477 = vmatpush1.bf16.msra.mxu0 %v1247
  %1478 = vmatprep.subr.bf16.mxu0 %v1256
  %1479 = vmatpush1.bf16.msra.mxu0 %v1255
  %1480 = vmatprep.subr.bf16.mxu0 %v1264
  %1481 = vmatpush1.bf16.msra.mxu0 %v1263
  %1482 = vmatprep.subr.bf16.mxu0 %v1272
  %1483 = vmatpush1.bf16.msra.mxu0 %v1271
  %1484 = vmatprep.subr.bf16.mxu0 %v1280
  %1485 = vmatpush1.bf16.msra.mxu0 %v1279
  %1486 = vmatprep.mubr.bf16.mxu0 %v602
  %1487 = vmatmul.mubr.bf16.gmra.mrb[0].mxu0 %v601
  %v1488 = vpop.f32.mrb[0].mxu0
  %v1489 = vadd.f32 %v744, %v1488
  %v1490 = vpop.f32.mrb[0].mxu0
  %v1491 = vadd.f32 %v748, %v1490
  %v1492 = vpop.f32.mrb[0].mxu0
  %v1493 = vpop.f32.mrb[0].mxu0
  %1494 = vdwg.mxu0
  %1495 = vmatprep.subr.bf16.mxu0 %v1162
  %1496 = vmatpush1.bf16.msra.mxu0 %v1161
  %1497 = vmatprep.subr.bf16.mxu0 %v1170
  %1498 = vmatpush1.bf16.msra.mxu0 %v1169
  %1499 = vmatprep.subr.bf16.mxu0 %v1178
  %1500 = vmatpush1.bf16.msra.mxu0 %v1177
  %1501 = vmatprep.subr.bf16.mxu0 %v1186
  %1502 = vmatpush1.bf16.msra.mxu0 %v1185
  %1503 = vmatprep.subr.bf16.mxu0 %v1194
  %1504 = vmatpush1.bf16.msra.mxu0 %v1193
  %1505 = vmatprep.subr.bf16.mxu0 %v1202
  %1506 = vmatpush1.bf16.msra.mxu0 %v1201
  %1507 = vmatprep.subr.bf16.mxu0 %v1210
  %1508 = vmatpush1.bf16.msra.mxu0 %v1209
  %1509 = vmatprep.subr.bf16.mxu0 %v1218
  %1510 = vmatpush1.bf16.msra.mxu0 %v1217
  %1511 = vmatprep.subr.bf16.mxu0 %v1226
  %1512 = vmatpush1.bf16.msra.mxu0 %v1225
  %1513 = vmatprep.subr.bf16.mxu0 %v1234
  %1514 = vmatpush1.bf16.msra.mxu0 %v1233
  %1515 = vmatprep.subr.bf16.mxu0 %v1242
  %1516 = vmatpush1.bf16.msra.mxu0 %v1241
  %1517 = vmatprep.subr.bf16.mxu0 %v1250
  %1518 = vmatpush1.bf16.msra.mxu0 %v1249
  %1519 = vmatprep.subr.bf16.mxu0 %v1258
  %1520 = vmatpush1.bf16.msra.mxu0 %v1257
  %1521 = vmatprep.subr.bf16.mxu0 %v1266
  %1522 = vmatpush1.bf16.msra.mxu0 %v1265
  %1523 = vmatprep.subr.bf16.mxu0 %v1274
  %1524 = vmatpush1.bf16.msra.mxu0 %v1273
  %1525 = vmatprep.subr.bf16.mxu0 %v1282
  %1526 = vmatpush1.bf16.msra.mxu0 %v1281
  %1527 = vmatprep.mubr.bf16.mxu0 %v602
  %1528 = vmatmul.mubr.bf16.gmra.mrb[0].mxu0 %v601
  %v1529 = vpop.f32.mrb[0].mxu0
  %v1530 = vadd.f32 %v752, %v1529
  %v1531 = vpop.f32.mrb[0].mxu0
  %v1532 = vadd.f32 %v756, %v1531
  %v1533 = vpop.f32.mrb[0].mxu0
  %v1534 = vpop.f32.mrb[0].mxu0
  %1535 = vdwg.mxu0
  %1536 = vmatprep.subr.bf16.mxu0 %v1164
  %1537 = vmatpush1.bf16.msra.mxu0 %v1163
  %1538 = vmatprep.subr.bf16.mxu0 %v1172
  %1539 = vmatpush1.bf16.msra.mxu0 %v1171
  %1540 = vmatprep.subr.bf16.mxu0 %v1180
  %1541 = vmatpush1.bf16.msra.mxu0 %v1179
  %1542 = vmatprep.subr.bf16.mxu0 %v1188
  %1543 = vmatpush1.bf16.msra.mxu0 %v1187
  %1544 = vmatprep.subr.bf16.mxu0 %v1196
  %1545 = vmatpush1.bf16.msra.mxu0 %v1195
  %1546 = vmatprep.subr.bf16.mxu0 %v1204
  %1547 = vmatpush1.bf16.msra.mxu0 %v1203
  %1548 = vmatprep.subr.bf16.mxu0 %v1212
  %1549 = vmatpush1.bf16.msra.mxu0 %v1211
  %1550 = vmatprep.subr.bf16.mxu0 %v1220
  %1551 = vmatpush1.bf16.msra.mxu0 %v1219
  %1552 = vmatprep.subr.bf16.mxu0 %v1228
  %1553 = vmatpush1.bf16.msra.mxu0 %v1227
  %1554 = vmatprep.subr.bf16.mxu0 %v1236
  %1555 = vmatpush1.bf16.msra.mxu0 %v1235
  %1556 = vmatprep.subr.bf16.mxu0 %v1244
  %1557 = vmatpush1.bf16.msra.mxu0 %v1243
  %1558 = vmatprep.subr.bf16.mxu0 %v1252
  %1559 = vmatpush1.bf16.msra.mxu0 %v1251
  %1560 = vmatprep.subr.bf16.mxu0 %v1260
  %1561 = vmatpush1.bf16.msra.mxu0 %v1259
  %1562 = vmatprep.subr.bf16.mxu0 %v1268
  %1563 = vmatpush1.bf16.msra.mxu0 %v1267
  %1564 = vmatprep.subr.bf16.mxu0 %v1276
  %1565 = vmatpush1.bf16.msra.mxu0 %v1275
  %1566 = vmatprep.subr.bf16.mxu0 %v1284
  %1567 = vmatpush1.bf16.msra.mxu0 %v1283
  %1568 = vmatprep.mubr.bf16.mxu0 %v602
  %1569 = vmatmul.mubr.bf16.gmra.mrb[0].mxu0 %v601
  %v1570 = vpop.f32.mrb[0].mxu0
  %v1571 = vadd.f32 %v760, %v1570
  %v1572 = vpop.f32.mrb[0].mxu0
  %v1573 = vadd.f32 %v764, %v1572
  %v1574 = vpop.f32.mrb[0].mxu0
  %v1575 = vpop.f32.mrb[0].mxu0
  %1576 = vdwg.mxu0
  %v1577 = vmax.f32 %v1448, 0.0
  %v1578 = vmax.f32 %v1450, 0.0
  %v1579 = vmax.f32 %v1489, 0.0
  %v1580 = vmax.f32 %v1491, 0.0
  %v1581 = vmax.f32 %v1530, 0.0
  %v1582 = vmax.f32 %v1532, 0.0
  %v1583 = vmax.f32 %v1571, 0.0
  %v1584 = vmax.f32 %v1573, 0.0
  %v1585 = vpack.c.bf16 %v110, %v110
  %v1586 = vpack.c.bf16 %v1577, %v1577
  %v1587 = vpack.c.bf16 %v1578, %v1578
  %v1588 = vpack.c.bf16 %v1579, %v1579
  %v1589 = vpack.c.bf16 %v1580, %v1580
  %v1590 = vpack.c.bf16 %v1581, %v1581
  %v1591 = vpack.c.bf16 %v1582, %v1582
  %v1592 = vpack.c.bf16 %v1583, %v1583
  %v1593 = vpack.c.bf16 %v1584, %v1584
  %v1594 = vld [vmem:[%s6] sm:$0xf]
  %v1595 = vld [vmem:[%s6 + $0x4] sm:$0xf]
  %v1596 = vld [vmem:[%s6 + $0x8] sm:$0xf]
  %v1597 = vld [vmem:[%s6 + $0xc] sm:$0xf]
  %v1598 = vld [vmem:[%s6 + $0x10] sm:$0xf]
  %v1599 = vld [vmem:[%s6 + $0x14] sm:$0xf]
  %v1600 = vld [vmem:[%s6 + $0x18] sm:$0xf]
  %v1601 = vld [vmem:[%s6 + $0x1c] sm:$0xf]
  %v1602 = vld [vmem:[%s6 + $0x20] sm:$0xf]
  %v1603 = vld [vmem:[%s6 + $0x24] sm:$0xf]
  %v1604 = vld [vmem:[%s6 + $0x28] sm:$0xf]
  %v1605 = vld [vmem:[%s6 + $0x2c] sm:$0xf]
  %v1606 = vld [vmem:[%s6 + $0x30] sm:$0xf]
  %v1607 = vld [vmem:[%s6 + $0x34] sm:$0xf]
  %v1608 = vld [vmem:[%s6 + $0x38] sm:$0xf]
  %v1609 = vld [vmem:[%s6 + $0x3c] sm:$0xf]
  %v1610 = vld [vmem:[%s6 + $0x40] sm:$0xf]
  %v1611 = vld [vmem:[%s6 + $0x44] sm:$0xf]
  %v1612 = vld [vmem:[%s6 + $0x48] sm:$0xf]
  %v1613 = vld [vmem:[%s6 + $0x4c] sm:$0xf]
  %v1614 = vld [vmem:[%s6 + $0x50] sm:$0xf]
  %v1615 = vld [vmem:[%s6 + $0x54] sm:$0xf]
  %v1616 = vld [vmem:[%s6 + $0x58] sm:$0xf]
  %v1617 = vld [vmem:[%s6 + $0x5c] sm:$0xf]
  %v1618 = vld [vmem:[%s6 + $0x60] sm:$0xf]
  %v1619 = vld [vmem:[%s6 + $0x64] sm:$0xf]
  %v1620 = vld [vmem:[%s6 + $0x68] sm:$0xf]
  %v1621 = vld [vmem:[%s6 + $0x6c] sm:$0xf]
  %v1622 = vld [vmem:[%s6 + $0x70] sm:$0xf]
  %v1623 = vld [vmem:[%s6 + $0x74] sm:$0xf]
  %v1624 = vld [vmem:[%s6 + $0x78] sm:$0xf]
  %v1625 = vld [vmem:[%s6 + $0x7c] sm:$0xf]
  %v1626 = vld [vmem:[%s6 + $0x80] sm:$0xf]
  %v1627 = vld [vmem:[%s6 + $0x84] sm:$0xf]
  %v1628 = vld [vmem:[%s6 + $0x88] sm:$0xf]
  %v1629 = vld [vmem:[%s6 + $0x8c] sm:$0xf]
  %v1630 = vld [vmem:[%s6 + $0x90] sm:$0xf]
  %v1631 = vld [vmem:[%s6 + $0x94] sm:$0xf]
  %v1632 = vld [vmem:[%s6 + $0x98] sm:$0xf]
  %v1633 = vld [vmem:[%s6 + $0x9c] sm:$0xf]
  %v1634 = vld [vmem:[%s6 + $0xa0] sm:$0xf]
  %v1635 = vld [vmem:[%s6 + $0xa4] sm:$0xf]
  %v1636 = vld [vmem:[%s6 + $0xa8] sm:$0xf]
  %v1637 = vld [vmem:[%s6 + $0xac] sm:$0xf]
  %v1638 = vld [vmem:[%s6 + $0xb0] sm:$0xf]
  %v1639 = vld [vmem:[%s6 + $0xb4] sm:$0xf]
  %v1640 = vld [vmem:[%s6 + $0xb8] sm:$0xf]
  %v1641 = vld [vmem:[%s6 + $0xbc] sm:$0xf]
  %v1642 = vld [vmem:[%s6 + $0xc0] sm:$0xf]
  %v1643 = vld [vmem:[%s6 + $0xc4] sm:$0xf]
  %v1644 = vld [vmem:[%s6 + $0xc8] sm:$0xf]
  %v1645 = vld [vmem:[%s6 + $0xcc] sm:$0xf]
  %v1646 = vld [vmem:[%s6 + $0xd0] sm:$0xf]
  %v1647 = vld [vmem:[%s6 + $0xd4] sm:$0xf]
  %v1648 = vld [vmem:[%s6 + $0xd8] sm:$0xf]
  %v1649 = vld [vmem:[%s6 + $0xdc] sm:$0xf]
  %v1650 = vld [vmem:[%s6 + $0xe0] sm:$0xf]
  %v1651 = vld [vmem:[%s6 + $0xe4] sm:$0xf]
  %v1652 = vld [vmem:[%s6 + $0xe8] sm:$0xf]
  %v1653 = vld [vmem:[%s6 + $0xec] sm:$0xf]
  %v1654 = vld [vmem:[%s6 + $0xf0] sm:$0xf]
  %v1655 = vld [vmem:[%s6 + $0xf4] sm:$0xf]
  %v1656 = vld [vmem:[%s6 + $0xf8] sm:$0xf]
  %v1657 = vld [vmem:[%s6 + $0xfc] sm:$0xf]
  %v1658 = vld [vmem:[%s6 + $0x100] sm:$0xf]
  %v1659 = vld [vmem:[%s6 + $0x104] sm:$0xf]
  %v1660 = vld [vmem:[%s6 + $0x108] sm:$0xf]
  %v1661 = vld [vmem:[%s6 + $0x10c] sm:$0xf]
  %v1662 = vld [vmem:[%s6 + $0x110] sm:$0xf]
  %v1663 = vld [vmem:[%s6 + $0x114] sm:$0xf]
  %v1664 = vld [vmem:[%s6 + $0x118] sm:$0xf]
  %v1665 = vld [vmem:[%s6 + $0x11c] sm:$0xf]
  %v1666 = vld [vmem:[%s6 + $0x120] sm:$0xf]
  %v1667 = vld [vmem:[%s6 + $0x124] sm:$0xf]
  %v1668 = vld [vmem:[%s6 + $0x128] sm:$0xf]
  %v1669 = vld [vmem:[%s6 + $0x12c] sm:$0xf]
  %v1670 = vld [vmem:[%s6 + $0x130] sm:$0xf]
  %v1671 = vld [vmem:[%s6 + $0x134] sm:$0xf]
  %v1672 = vld [vmem:[%s6 + $0x138] sm:$0xf]
  %v1673 = vld [vmem:[%s6 + $0x13c] sm:$0xf]
  %v1674 = vld [vmem:[%s6 + $0x140] sm:$0xf]
  %v1675 = vld [vmem:[%s6 + $0x144] sm:$0xf]
  %v1676 = vld [vmem:[%s6 + $0x148] sm:$0xf]
  %v1677 = vld [vmem:[%s6 + $0x14c] sm:$0xf]
  %v1678 = vld [vmem:[%s6 + $0x150] sm:$0xf]
  %v1679 = vld [vmem:[%s6 + $0x154] sm:$0xf]
  %v1680 = vld [vmem:[%s6 + $0x158] sm:$0xf]
  %v1681 = vld [vmem:[%s6 + $0x15c] sm:$0xf]
  %v1682 = vld [vmem:[%s6 + $0x160] sm:$0xf]
  %v1683 = vld [vmem:[%s6 + $0x164] sm:$0xf]
  %v1684 = vld [vmem:[%s6 + $0x168] sm:$0xf]
  %v1685 = vld [vmem:[%s6 + $0x16c] sm:$0xf]
  %v1686 = vld [vmem:[%s6 + $0x170] sm:$0xf]
  %v1687 = vld [vmem:[%s6 + $0x174] sm:$0xf]
  %v1688 = vld [vmem:[%s6 + $0x178] sm:$0xf]
  %v1689 = vld [vmem:[%s6 + $0x17c] sm:$0xf]
  %v1690 = vld [vmem:[%s6 + $0x180] sm:$0xf]
  %v1691 = vld [vmem:[%s6 + $0x184] sm:$0xf]
  %v1692 = vld [vmem:[%s6 + $0x188] sm:$0xf]
  %v1693 = vld [vmem:[%s6 + $0x18c] sm:$0xf]
  %v1694 = vld [vmem:[%s6 + $0x190] sm:$0xf]
  %v1695 = vld [vmem:[%s6 + $0x194] sm:$0xf]
  %v1696 = vld [vmem:[%s6 + $0x198] sm:$0xf]
  %v1697 = vld [vmem:[%s6 + $0x19c] sm:$0xf]
  %v1698 = vld [vmem:[%s6 + $0x1a0] sm:$0xf]
  %v1699 = vld [vmem:[%s6 + $0x1a4] sm:$0xf]
  %v1700 = vld [vmem:[%s6 + $0x1a8] sm:$0xf]
  %v1701 = vld [vmem:[%s6 + $0x1ac] sm:$0xf]
  %v1702 = vld [vmem:[%s6 + $0x1b0] sm:$0xf]
  %v1703 = vld [vmem:[%s6 + $0x1b4] sm:$0xf]
  %v1704 = vld [vmem:[%s6 + $0x1b8] sm:$0xf]
  %v1705 = vld [vmem:[%s6 + $0x1bc] sm:$0xf]
  %v1706 = vld [vmem:[%s6 + $0x1c0] sm:$0xf]
  %v1707 = vld [vmem:[%s6 + $0x1c4] sm:$0xf]
  %v1708 = vld [vmem:[%s6 + $0x1c8] sm:$0xf]
  %v1709 = vld [vmem:[%s6 + $0x1cc] sm:$0xf]
  %v1710 = vld [vmem:[%s6 + $0x1d0] sm:$0xf]
  %v1711 = vld [vmem:[%s6 + $0x1d4] sm:$0xf]
  %v1712 = vld [vmem:[%s6 + $0x1d8] sm:$0xf]
  %v1713 = vld [vmem:[%s6 + $0x1dc] sm:$0xf]
  %v1714 = vld [vmem:[%s6 + $0x1e0] sm:$0xf]
  %v1715 = vld [vmem:[%s6 + $0x1e4] sm:$0xf]
  %v1716 = vld [vmem:[%s6 + $0x1e8] sm:$0xf]
  %v1717 = vld [vmem:[%s6 + $0x1ec] sm:$0xf]
  %v1718 = vld [vmem:[%s6 + $0x1f0] sm:$0xf]
  %v1719 = vld [vmem:[%s6 + $0x1f4] sm:$0xf]
  %v1720 = vld [vmem:[%s6 + $0x1f8] sm:$0xf]
  %v1721 = vld [vmem:[%s6 + $0x1fc] sm:$0xf]
  %v1722 = vld [vmem:[%s6 + $0x200] sm:$0xf]
  %v1723 = vld [vmem:[%s6 + $0x204] sm:$0xf]
  %v1724 = vld [vmem:[%s6 + $0x208] sm:$0xf]
  %v1725 = vld [vmem:[%s6 + $0x20c] sm:$0xf]
  %v1726 = vld [vmem:[%s6 + $0x210] sm:$0xf]
  %v1727 = vld [vmem:[%s6 + $0x214] sm:$0xf]
  %v1728 = vld [vmem:[%s6 + $0x218] sm:$0xf]
  %v1729 = vld [vmem:[%s6 + $0x21c] sm:$0xf]
  %v1730 = vld [vmem:[%s6 + $0x220] sm:$0xf]
  %v1731 = vld [vmem:[%s6 + $0x224] sm:$0xf]
  %v1732 = vld [vmem:[%s6 + $0x228] sm:$0xf]
  %v1733 = vld [vmem:[%s6 + $0x22c] sm:$0xf]
  %v1734 = vld [vmem:[%s6 + $0x230] sm:$0xf]
  %v1735 = vld [vmem:[%s6 + $0x234] sm:$0xf]
  %v1736 = vld [vmem:[%s6 + $0x238] sm:$0xf]
  %v1737 = vld [vmem:[%s6 + $0x23c] sm:$0xf]
  %v1738 = vld [vmem:[%s7] sm:$0x1]
  %v1740 = vlaneseq
  %v1741 = vshrl.u32 %v1740, 7
  %v1742 = vsub.s32 0, %v1741
  %v1743 = vrot.slane %v1738, %v1742
  %v1889 = vunpack.c.l.b16 %v1594
  %v1890 = vunpack.c.l.b16 %v1595
  %v1891 = vunpack.c.l.b16 %v1596
  %v1892 = vunpack.c.l.b16 %v1597
  %v1893 = vunpack.c.l.b16 %v1598
  %v1894 = vunpack.c.l.b16 %v1599
  %v1895 = vunpack.c.l.b16 %v1600
  %v1896 = vunpack.c.l.b16 %v1601
  %v1897 = vunpack.c.l.b16 %v1602
  %v1898 = vunpack.c.l.b16 %v1603
  %v1899 = vunpack.c.l.b16 %v1604
  %v1900 = vunpack.c.l.b16 %v1605
  %v1901 = vunpack.c.l.b16 %v1606
  %v1902 = vunpack.c.l.b16 %v1607
  %v1903 = vunpack.c.l.b16 %v1608
  %v1904 = vunpack.c.l.b16 %v1609
  %v1905 = vunpack.c.l.b16 %v1610
  %v1906 = vunpack.c.l.b16 %v1611
  %v1907 = vunpack.c.l.b16 %v1612
  %v1908 = vunpack.c.l.b16 %v1613
  %v1909 = vunpack.c.l.b16 %v1614
  %v1910 = vunpack.c.l.b16 %v1615
  %v1911 = vunpack.c.l.b16 %v1616
  %v1912 = vunpack.c.l.b16 %v1617
  %v1913 = vunpack.c.l.b16 %v1618
  %v1914 = vunpack.c.l.b16 %v1619
  %v1915 = vunpack.c.l.b16 %v1620
  %v1916 = vunpack.c.l.b16 %v1621
  %v1917 = vunpack.c.l.b16 %v1622
  %v1918 = vunpack.c.l.b16 %v1623
  %v1919 = vunpack.c.l.b16 %v1624
  %v1920 = vunpack.c.l.b16 %v1625
  %v1921 = vunpack.c.l.b16 %v1626
  %v1922 = vunpack.c.l.b16 %v1627
  %v1923 = vunpack.c.l.b16 %v1628
  %v1924 = vunpack.c.l.b16 %v1629
  %v1925 = vunpack.c.l.b16 %v1630
  %v1926 = vunpack.c.l.b16 %v1631
  %v1927 = vunpack.c.l.b16 %v1632
  %v1928 = vunpack.c.l.b16 %v1633
  %v1929 = vunpack.c.l.b16 %v1634
  %v1930 = vunpack.c.l.b16 %v1635
  %v1931 = vunpack.c.l.b16 %v1636
  %v1932 = vunpack.c.l.b16 %v1637
  %v1933 = vunpack.c.l.b16 %v1638
  %v1934 = vunpack.c.l.b16 %v1639
  %v1935 = vunpack.c.l.b16 %v1640
  %v1936 = vunpack.c.l.b16 %v1641
  %v1937 = vunpack.c.l.b16 %v1642
  %v1938 = vunpack.c.l.b16 %v1643
  %v1939 = vunpack.c.l.b16 %v1644
  %v1940 = vunpack.c.l.b16 %v1645
  %v1941 = vunpack.c.l.b16 %v1646
  %v1942 = vunpack.c.l.b16 %v1647
  %v1943 = vunpack.c.l.b16 %v1648
  %v1944 = vunpack.c.l.b16 %v1649
  %v1945 = vunpack.c.l.b16 %v1650
  %v1946 = vunpack.c.l.b16 %v1651
  %v1947 = vunpack.c.l.b16 %v1652
  %v1948 = vunpack.c.l.b16 %v1653
  %v1949 = vunpack.c.l.b16 %v1654
  %v1950 = vunpack.c.l.b16 %v1655
  %v1951 = vunpack.c.l.b16 %v1656
  %v1952 = vunpack.c.l.b16 %v1657
  %v1953 = vunpack.c.l.b16 %v1658
  %v1954 = vunpack.c.l.b16 %v1659
  %v1955 = vunpack.c.l.b16 %v1660
  %v1956 = vunpack.c.l.b16 %v1661
  %v1957 = vunpack.c.l.b16 %v1662
  %v1958 = vunpack.c.l.b16 %v1663
  %v1959 = vunpack.c.l.b16 %v1664
  %v1960 = vunpack.c.l.b16 %v1665
  %v1961 = vunpack.c.l.b16 %v1666
  %v1962 = vunpack.c.l.b16 %v1667
  %v1963 = vunpack.c.l.b16 %v1668
  %v1964 = vunpack.c.l.b16 %v1669
  %v1965 = vunpack.c.l.b16 %v1670
  %v1966 = vunpack.c.l.b16 %v1671
  %v1967 = vunpack.c.l.b16 %v1672
  %v1968 = vunpack.c.l.b16 %v1673
  %v1969 = vunpack.c.l.b16 %v1674
  %v1970 = vunpack.c.l.b16 %v1675
  %v1971 = vunpack.c.l.b16 %v1676
  %v1972 = vunpack.c.l.b16 %v1677
  %v1973 = vunpack.c.l.b16 %v1678
  %v1974 = vunpack.c.l.b16 %v1679
  %v1975 = vunpack.c.l.b16 %v1680
  %v1976 = vunpack.c.l.b16 %v1681
  %v1977 = vunpack.c.l.b16 %v1682
  %v1978 = vunpack.c.l.b16 %v1683
  %v1979 = vunpack.c.l.b16 %v1684
  %v1980 = vunpack.c.l.b16 %v1685
  %v1981 = vunpack.c.l.b16 %v1686
  %v1982 = vunpack.c.l.b16 %v1687
  %v1983 = vunpack.c.l.b16 %v1688
  %v1984 = vunpack.c.l.b16 %v1689
  %v1985 = vunpack.c.l.b16 %v1690
  %v1986 = vunpack.c.l.b16 %v1691
  %v1987 = vunpack.c.l.b16 %v1692
  %v1988 = vunpack.c.l.b16 %v1693
  %v1989 = vunpack.c.l.b16 %v1694
  %v1990 = vunpack.c.l.b16 %v1695
  %v1991 = vunpack.c.l.b16 %v1696
  %v1992 = vunpack.c.l.b16 %v1697
  %v1993 = vunpack.c.l.b16 %v1698
  %v1994 = vunpack.c.l.b16 %v1699
  %v1995 = vunpack.c.l.b16 %v1700
  %v1996 = vunpack.c.l.b16 %v1701
  %v1997 = vunpack.c.l.b16 %v1702
  %v1998 = vunpack.c.l.b16 %v1703
  %v1999 = vunpack.c.l.b16 %v1704
  %v2000 = vunpack.c.l.b16 %v1705
  %v2001 = vunpack.c.l.b16 %v1706
  %v2002 = vunpack.c.l.b16 %v1707
  %v2003 = vunpack.c.l.b16 %v1708
  %v2004 = vunpack.c.l.b16 %v1709
  %v2005 = vunpack.c.l.b16 %v1710
  %v2006 = vunpack.c.l.b16 %v1711
  %v2007 = vunpack.c.l.b16 %v1712
  %v2008 = vunpack.c.l.b16 %v1713
  %v2009 = vunpack.c.l.b16 %v1714
  %v2010 = vunpack.c.l.b16 %v1715
  %v2011 = vunpack.c.l.b16 %v1716
  %v2012 = vunpack.c.l.b16 %v1717
  %v2013 = vunpack.c.l.b16 %v1718
  %v2014 = vunpack.c.l.b16 %v1719
  %v2015 = vunpack.c.l.b16 %v1720
  %v2016 = vunpack.c.l.b16 %v1721
  %v2017 = vunpack.c.l.b16 %v1722
  %v2018 = vunpack.c.l.b16 %v1723
  %v2019 = vunpack.c.l.b16 %v1724
  %v2020 = vunpack.c.l.b16 %v1725
  %v2021 = vunpack.c.l.b16 %v1726
  %v2022 = vunpack.c.l.b16 %v1727
  %v2023 = vunpack.c.l.b16 %v1728
  %v2024 = vunpack.c.l.b16 %v1729
  %v2025 = vunpack.c.l.b16 %v1730
  %v2026 = vunpack.c.l.b16 %v1731
  %v2027 = vunpack.c.l.b16 %v1732
  %v2028 = vunpack.c.l.b16 %v1733
  %v2029 = vunpack.c.l.b16 %v1734
  %v2030 = vunpack.c.l.b16 %v1735
  %v2031 = vunpack.c.l.b16 %v1736
  %v2032 = vunpack.c.l.b16 %v1737
  %v2033 = vpack.c.b16 %v1890, %v1889
  %v2034 = vpack.c.b16 %v1892, %v1891
  %v2035 = vpack.c.b16 %v1894, %v1893
  %v2036 = vpack.c.b16 %v1896, %v1895
  %v2037 = vpack.c.b16 %v1898, %v1897
  %v2038 = vpack.c.b16 %v1900, %v1899
  %v2039 = vpack.c.b16 %v1902, %v1901
  %v2040 = vpack.c.b16 %v1904, %v1903
  %v2041 = vpack.c.b16 %v1906, %v1905
  %v2042 = vpack.c.b16 %v1908, %v1907
  %v2043 = vpack.c.b16 %v1910, %v1909
  %v2044 = vpack.c.b16 %v1912, %v1911
  %v2045 = vpack.c.b16 %v1914, %v1913
  %v2046 = vpack.c.b16 %v1916, %v1915
  %v2047 = vpack.c.b16 %v1918, %v1917
  %v2048 = vpack.c.b16 %v1920, %v1919
  %v2049 = vpack.c.b16 %v1922, %v1921
  %v2050 = vpack.c.b16 %v1924, %v1923
  %v2051 = vpack.c.b16 %v1926, %v1925
  %v2052 = vpack.c.b16 %v1928, %v1927
  %v2053 = vpack.c.b16 %v1930, %v1929
  %v2054 = vpack.c.b16 %v1932, %v1931
  %v2055 = vpack.c.b16 %v1934, %v1933
  %v2056 = vpack.c.b16 %v1936, %v1935
  %v2057 = vpack.c.b16 %v1938, %v1937
  %v2058 = vpack.c.b16 %v1940, %v1939
  %v2059 = vpack.c.b16 %v1942, %v1941
  %v2060 = vpack.c.b16 %v1944, %v1943
  %v2061 = vpack.c.b16 %v1946, %v1945
  %v2062 = vpack.c.b16 %v1948, %v1947
  %v2063 = vpack.c.b16 %v1950, %v1949
  %v2064 = vpack.c.b16 %v1952, %v1951
  %v2065 = vpack.c.b16 %v1954, %v1953
  %v2066 = vpack.c.b16 %v1956, %v1955
  %v2067 = vpack.c.b16 %v1958, %v1957
  %v2068 = vpack.c.b16 %v1960, %v1959
  %v2069 = vpack.c.b16 %v1962, %v1961
  %v2070 = vpack.c.b16 %v1964, %v1963
  %v2071 = vpack.c.b16 %v1966, %v1965
  %v2072 = vpack.c.b16 %v1968, %v1967
  %v2073 = vpack.c.b16 %v1970, %v1969
  %v2074 = vpack.c.b16 %v1972, %v1971
  %v2075 = vpack.c.b16 %v1974, %v1973
  %v2076 = vpack.c.b16 %v1976, %v1975
  %v2077 = vpack.c.b16 %v1978, %v1977
  %v2078 = vpack.c.b16 %v1980, %v1979
  %v2079 = vpack.c.b16 %v1982, %v1981
  %v2080 = vpack.c.b16 %v1984, %v1983
  %v2081 = vpack.c.b16 %v1986, %v1985
  %v2082 = vpack.c.b16 %v1988, %v1987
  %v2083 = vpack.c.b16 %v1990, %v1989
  %v2084 = vpack.c.b16 %v1992, %v1991
  %v2085 = vpack.c.b16 %v1994, %v1993
  %v2086 = vpack.c.b16 %v1996, %v1995
  %v2087 = vpack.c.b16 %v1998, %v1997
  %v2088 = vpack.c.b16 %v2000, %v1999
  %v2089 = vpack.c.b16 %v2002, %v2001
  %v2090 = vpack.c.b16 %v2004, %v2003
  %v2091 = vpack.c.b16 %v2006, %v2005
  %v2092 = vpack.c.b16 %v2008, %v2007
  %v2093 = vpack.c.b16 %v2010, %v2009
  %v2094 = vpack.c.b16 %v2012, %v2011
  %v2095 = vpack.c.b16 %v2014, %v2013
  %v2096 = vpack.c.b16 %v2016, %v2015
  %v2097 = vpack.c.b16 %v2018, %v2017
  %v2098 = vpack.c.b16 %v2020, %v2019
  %v2099 = vpack.c.b16 %v2022, %v2021
  %v2100 = vpack.c.b16 %v2024, %v2023
  %v2101 = vpack.c.b16 %v2026, %v2025
  %v2102 = vpack.c.b16 %v2028, %v2027
  %v2103 = vpack.c.b16 %v2030, %v2029
  %v2104 = vpack.c.b16 %v2032, %v2031
  %2177 = vmatprep.subr.bf16.mxu0 0
  %2178 = vmatpush1.bf16.msra.mxu0 %v2033
  %2179 = vmatprep.subr.bf16.mxu0 0
  %2180 = vmatpush1.bf16.msra.mxu0 %v2034
  %2181 = vmatprep.subr.bf16.mxu0 0
  %2182 = vmatpush1.bf16.msra.mxu0 %v2035
  %2183 = vmatprep.subr.bf16.mxu0 0
  %2184 = vmatpush1.bf16.msra.mxu0 %v2036
  %2185 = vmatprep.subr.bf16.mxu0 0
  %2186 = vmatpush1.bf16.msra.mxu0 %v2037
  %2187 = vmatprep.subr.bf16.mxu0 0
  %2188 = vmatpush1.bf16.msra.mxu0 %v2038
  %2189 = vmatprep.subr.bf16.mxu0 0
  %2190 = vmatpush1.bf16.msra.mxu0 %v2039
  %2191 = vmatprep.subr.bf16.mxu0 0
  %2192 = vmatpush1.bf16.msra.mxu0 %v2040
  %2193 = vmatprep.subr.bf16.mxu0 0
  %2194 = vmatpush1.bf16.msra.mxu0 %v2041
  %2195 = vmatprep.subr.bf16.mxu0 0
  %2196 = vmatpush1.bf16.msra.mxu0 %v2042
  %2197 = vmatprep.subr.bf16.mxu0 0
  %2198 = vmatpush1.bf16.msra.mxu0 %v2043
  %2199 = vmatprep.subr.bf16.mxu0 0
  %2200 = vmatpush1.bf16.msra.mxu0 %v2044
  %2201 = vmatprep.subr.bf16.mxu0 0
  %2202 = vmatpush1.bf16.msra.mxu0 %v2045
  %2203 = vmatprep.subr.bf16.mxu0 0
  %2204 = vmatpush1.bf16.msra.mxu0 %v2046
  %2205 = vmatprep.subr.bf16.mxu0 0
  %2206 = vmatpush1.bf16.msra.mxu0 %v2047
  %2207 = vmatprep.subr.bf16.mxu0 0
  %2208 = vmatpush1.bf16.msra.mxu0 %v2048
  %2209 = vmatprep.mubr.bf16.mxu0 %v1586
  %2210 = vmatmul.mubr.bf16.gmra.mrb[0].mxu0 %v1585
  %v2211 = vpop.f32.mrb[0].mxu0
  %v2212 = vadd.f32 %v1743, %v2211
  %v2213 = vpop.f32.mrb[0].mxu0
  %v2214 = vpop.f32.mrb[0].mxu0
  %v2215 = vpop.f32.mrb[0].mxu0
  %2216 = vdwg.mxu0
  %2217 = vmatprep.subr.bf16.mxu0 0
  %2218 = vmatpush1.bf16.msra.mxu0 %v2049
  %2219 = vmatprep.subr.bf16.mxu0 0
  %2220 = vmatpush1.bf16.msra.mxu0 %v2050
  %2221 = vmatprep.subr.bf16.mxu0 0
  %2222 = vmatpush1.bf16.msra.mxu0 %v2051
  %2223 = vmatprep.subr.bf16.mxu0 0
  %2224 = vmatpush1.bf16.msra.mxu0 %v2052
  %2225 = vmatprep.subr.bf16.mxu0 0
  %2226 = vmatpush1.bf16.msra.mxu0 %v2053
  %2227 = vmatprep.subr.bf16.mxu0 0
  %2228 = vmatpush1.bf16.msra.mxu0 %v2054
  %2229 = vmatprep.subr.bf16.mxu0 0
  %2230 = vmatpush1.bf16.msra.mxu0 %v2055
  %2231 = vmatprep.subr.bf16.mxu0 0
  %2232 = vmatpush1.bf16.msra.mxu0 %v2056
  %2233 = vmatprep.subr.bf16.mxu0 0
  %2234 = vmatpush1.bf16.msra.mxu0 %v2057
  %2235 = vmatprep.subr.bf16.mxu0 0
  %2236 = vmatpush1.bf16.msra.mxu0 %v2058
  %2237 = vmatprep.subr.bf16.mxu0 0
  %2238 = vmatpush1.bf16.msra.mxu0 %v2059
  %2239 = vmatprep.subr.bf16.mxu0 0
  %2240 = vmatpush1.bf16.msra.mxu0 %v2060
  %2241 = vmatprep.subr.bf16.mxu0 0
  %2242 = vmatpush1.bf16.msra.mxu0 %v2061
  %2243 = vmatprep.subr.bf16.mxu0 0
  %2244 = vmatpush1.bf16.msra.mxu0 %v2062
  %2245 = vmatprep.subr.bf16.mxu0 0
  %2246 = vmatpush1.bf16.msra.mxu0 %v2063
  %2247 = vmatprep.subr.bf16.mxu0 0
  %2248 = vmatpush1.bf16.msra.mxu0 %v2064
  %2249 = vmatprep.mubr.bf16.mxu0 %v1588
  %2250 = vmatmul.mubr.bf16.gmra.mrb[0].mxu0 %v1587
  %v2251 = vpop.f32.mrb[0].mxu0
  %v2252 = vadd.f32 %v2212, %v2251
  %v2253 = vpop.f32.mrb[0].mxu0
  %v2254 = vpop.f32.mrb[0].mxu0
  %v2255 = vpop.f32.mrb[0].mxu0
  %2256 = vdwg.mxu0
  %2257 = vmatprep.subr.bf16.mxu0 0
  %2258 = vmatpush1.bf16.msra.mxu0 %v2065
  %2259 = vmatprep.subr.bf16.mxu0 0
  %2260 = vmatpush1.bf16.msra.mxu0 %v2066
  %2261 = vmatprep.subr.bf16.mxu0 0
  %2262 = vmatpush1.bf16.msra.mxu0 %v2067
  %2263 = vmatprep.subr.bf16.mxu0 0
  %2264 = vmatpush1.bf16.msra.mxu0 %v2068
  %2265 = vmatprep.subr.bf16.mxu0 0
  %2266 = vmatpush1.bf16.msra.mxu0 %v2069
  %2267 = vmatprep.subr.bf16.mxu0 0
  %2268 = vmatpush1.bf16.msra.mxu0 %v2070
  %2269 = vmatprep.subr.bf16.mxu0 0
  %2270 = vmatpush1.bf16.msra.mxu0 %v2071
  %2271 = vmatprep.subr.bf16.mxu0 0
  %2272 = vmatpush1.bf16.msra.mxu0 %v2072
  %2273 = vmatprep.subr.bf16.mxu0 0
  %2274 = vmatpush1.bf16.msra.mxu0 %v2073
  %2275 = vmatprep.subr.bf16.mxu0 0
  %2276 = vmatpush1.bf16.msra.mxu0 %v2074
  %2277 = vmatprep.subr.bf16.mxu0 0
  %2278 = vmatpush1.bf16.msra.mxu0 %v2075
  %2279 = vmatprep.subr.bf16.mxu0 0
  %2280 = vmatpush1.bf16.msra.mxu0 %v2076
  %2281 = vmatprep.subr.bf16.mxu0 0
  %2282 = vmatpush1.bf16.msra.mxu0 %v2077
  %2283 = vmatprep.subr.bf16.mxu0 0
  %2284 = vmatpush1.bf16.msra.mxu0 %v2078
  %2285 = vmatprep.subr.bf16.mxu0 0
  %2286 = vmatpush1.bf16.msra.mxu0 %v2079
  %2287 = vmatprep.subr.bf16.mxu0 0
  %2288 = vmatpush1.bf16.msra.mxu0 %v2080
  %2289 = vmatprep.mubr.bf16.mxu0 %v1590
  %2290 = vmatmul.mubr.bf16.gmra.mrb[0].mxu0 %v1589
  %v2291 = vpop.f32.mrb[0].mxu0
  %v2292 = vadd.f32 %v2252, %v2291
  %v2293 = vpop.f32.mrb[0].mxu0
  %v2294 = vpop.f32.mrb[0].mxu0
  %v2295 = vpop.f32.mrb[0].mxu0
  %2296 = vdwg.mxu0
  %2297 = vmatprep.subr.bf16.mxu0 0
  %2298 = vmatpush1.bf16.msra.mxu0 %v2081
  %2299 = vmatprep.subr.bf16.mxu0 0
  %2300 = vmatpush1.bf16.msra.mxu0 %v2082
  %2301 = vmatprep.subr.bf16.mxu0 0
  %2302 = vmatpush1.bf16.msra.mxu0 %v2083
  %2303 = vmatprep.subr.bf16.mxu0 0
  %2304 = vmatpush1.bf16.msra.mxu0 %v2084
  %2305 = vmatprep.subr.bf16.mxu0 0
  %2306 = vmatpush1.bf16.msra.mxu0 %v2085
  %2307 = vmatprep.subr.bf16.mxu0 0
  %2308 = vmatpush1.bf16.msra.mxu0 %v2086
  %2309 = vmatprep.subr.bf16.mxu0 0
  %2310 = vmatpush1.bf16.msra.mxu0 %v2087
  %2311 = vmatprep.subr.bf16.mxu0 0
  %2312 = vmatpush1.bf16.msra.mxu0 %v2088
  %2313 = vmatprep.subr.bf16.mxu0 0
  %2314 = vmatpush1.bf16.msra.mxu0 %v2089
  %2315 = vmatprep.subr.bf16.mxu0 0
  %2316 = vmatpush1.bf16.msra.mxu0 %v2090
  %2317 = vmatprep.subr.bf16.mxu0 0
  %2318 = vmatpush1.bf16.msra.mxu0 %v2091
  %2319 = vmatprep.subr.bf16.mxu0 0
  %2320 = vmatpush1.bf16.msra.mxu0 %v2092
  %2321 = vmatprep.subr.bf16.mxu0 0
  %2322 = vmatpush1.bf16.msra.mxu0 %v2093
  %2323 = vmatprep.subr.bf16.mxu0 0
  %2324 = vmatpush1.bf16.msra.mxu0 %v2094
  %2325 = vmatprep.subr.bf16.mxu0 0
  %2326 = vmatpush1.bf16.msra.mxu0 %v2095
  %2327 = vmatprep.subr.bf16.mxu0 0
  %2328 = vmatpush1.bf16.msra.mxu0 %v2096
  %2329 = vmatprep.mubr.bf16.mxu0 %v1592
  %2330 = vmatmul.mubr.bf16.gmra.mrb[0].mxu0 %v1591
  %v2331 = vpop.f32.mrb[0].mxu0
  %v2332 = vadd.f32 %v2292, %v2331
  %v2333 = vpop.f32.mrb[0].mxu0
  %v2334 = vpop.f32.mrb[0].mxu0
  %v2335 = vpop.f32.mrb[0].mxu0
  %2336 = vdwg.mxu0
  %2337 = vmatprep.subr.bf16.mxu0 0
  %2338 = vmatpush1.bf16.msra.mxu0 %v2097
  %2339 = vmatprep.subr.bf16.mxu0 0
  %2340 = vmatpush1.bf16.msra.mxu0 %v2098
  %2341 = vmatprep.subr.bf16.mxu0 0
  %2342 = vmatpush1.bf16.msra.mxu0 %v2099
  %2343 = vmatprep.subr.bf16.mxu0 0
  %2344 = vmatpush1.bf16.msra.mxu0 %v2100
  %2345 = vmatprep.subr.bf16.mxu0 0
  %2346 = vmatpush1.bf16.msra.mxu0 %v2101
  %2347 = vmatprep.subr.bf16.mxu0 0
  %2348 = vmatpush1.bf16.msra.mxu0 %v2102
  %2349 = vmatprep.subr.bf16.mxu0 0
  %2350 = vmatpush1.bf16.msra.mxu0 %v2103
  %2351 = vmatprep.subr.bf16.mxu0 0
  %2352 = vmatpush1.bf16.msra.mxu0 %v2104
  %2353 = vmatprep.subr.bf16.mxu0 0
  %2354 = vmatpush1.bf16.msra.mxu0 0
  %2355 = vmatprep.subr.bf16.mxu0 0
  %2356 = vmatpush1.bf16.msra.mxu0 0
  %2357 = vmatprep.subr.bf16.mxu0 0
  %2358 = vmatpush1.bf16.msra.mxu0 0
  %2359 = vmatprep.subr.bf16.mxu0 0
  %2360 = vmatpush1.bf16.msra.mxu0 0
  %2361 = vmatprep.subr.bf16.mxu0 0
  %2362 = vmatpush1.bf16.msra.mxu0 0
  %2363 = vmatprep.subr.bf16.mxu0 0
  %2364 = vmatpush1.bf16.msra.mxu0 0
  %2365 = vmatprep.subr.bf16.mxu0 0
  %2366 = vmatpush1.bf16.msra.mxu0 0
  %2367 = vmatprep.subr.bf16.mxu0 0
  %2368 = vmatpush1.bf16.msra.mxu0 0
  %2369 = vmatprep.mubr.bf16.mxu0 0
  %2370 = vmatmul.mubr.bf16.gmra.mrb[0].mxu0 %v1593
  %v2371 = vpop.f32.mrb[0].mxu0
  %v2372 = vadd.f32 %v2332, %v2371
  %v2373 = vpop.f32.mrb[0].mxu0
  %v2374 = vpop.f32.mrb[0].mxu0
  %v2375 = vpop.f32.mrb[0].mxu0
  %2376 = vdwg.mxu0
  %2377 = vst [vmem:[%s8] sm:$0xff] %v2372
  // Predicated region
  $region34: #{_lambda_.1} parent=0 // pred_check
    _
  $region35: #{_lambda_.1} parent=0 // pred_check_branch
    %2379 = sbr.rel (0) target = $region37
  $region36: #{_lambda_.1} parent=0 // pred_region
    _
  $region37: #{_lambda_.1} parent=0 // pred_fallthru
    _
  // Predicated region
  $region38: #{_lambda_.1} parent=0 // pred_check
    _
  $region39: #{_lambda_.1} parent=0 // pred_check_branch
    %2381 = sbr.rel (0) target = $region41
  $region40: #{_lambda_.1} parent=0 // pred_region
    _
  $region41: #{_lambda_.1} parent=0 // pred_fallthru
    _

</llo_original>
